<compile_context>
chip_gen: v7x
topology: tpu7x:2x2x1
jax: 0.10.0
libtpu: 0.0.40
codegen_flags: <defaults>
</compile_context>

<pallas_src>
import jax
import jax.numpy as jnp
from jax import lax
from jax.experimental import pallas as pl
from jax.experimental.pallas import tpu as pltpu


_LANE = 128
_SUBLANE = 8
# (1, 8, 16384) f32 block = 512 KiB.  8 streams x 2 buffers + 4 accumulators
# ~= 10 MiB -> fits the 32 MiB default scoped-VMEM limit on v5e/v6e/v7x.
_TILE_LANE_CAP = 16384


def _pick_tile_lanes(lfull, cap=_TILE_LANE_CAP):
    """Largest divisor of lfull that is a multiple of 128 and <= cap."""
    if lfull <= cap:
        return lfull
    units = lfull // _LANE
    cap_units = cap // _LANE
    best = 1
    for d in range(1, cap_units + 1):
        if units % d == 0:
            best = d
    return best * _LANE


def _fused_cross_loss_kernel(
        idx1_ref, idx2_ref,                            # scalar prefetch (SMEM)
        fhrf1_ref, fhrf2_ref, fnf1_ref, fnf2_ref,      # subset feature tiles
        fhr_g1_ref, fhr_g2_ref, fn_g1_ref, fn_g2_ref,  # gathered full feature tiles
        hrf1_ref, hrf2_ref, gt_ref, hr_ref,            # VMEM-resident HR traces
        out_ref,                                       # (1, 8) f32 SMEM
        acc_fhr1, acc_fhr2, acc_fn1, acc_fn2):         # f32 VMEM accumulators
    j = pl.program_id(0)
    t = pl.program_id(1)
    f32 = jnp.float32
    first = jnp.logical_and(j == 0, t == 0)
    last = jnp.logical_and(j == pl.num_programs(0) - 1,
                           t == pl.num_programs(1) - 1)

    @pl.when(first)
    def _init():
        acc_fhr1[...] = jnp.zeros_like(acc_fhr1)
        acc_fhr2[...] = jnp.zeros_like(acc_fhr2)
        acc_fn1[...] = jnp.zeros_like(acc_fn1)
        acc_fn2[...] = jnp.zeros_like(acc_fn2)

    # Feature-map terms: |subset_tile - full_tile[idx]| -> pure VPU adds into
    # f32 VMEM accumulators (f32 upcast in-kernel, native dtype on the wire).
    acc_fhr1[...] += jnp.abs(fhrf1_ref[...].astype(f32) - fhr_g1_ref[...].astype(f32))
    acc_fhr2[...] += jnp.abs(fhrf2_ref[...].astype(f32) - fhr_g2_ref[...].astype(f32))
    acc_fn1[...] += jnp.abs(fnf1_ref[...].astype(f32) - fn_g1_ref[...].astype(f32))
    acc_fn2[...] += jnp.abs(fnf2_ref[...].astype(f32) - fn_g2_ref[...].astype(f32))

    # Single epilogue: HR-trace terms (tiny, resident arrays, gathered in-kernel
    # with the prefetched idx scalars) + one XLU reduction per output term.
    @pl.when(last)
    def _finalize():
        nsub = hrf1_ref.shape[0]
        tdim = gt_ref.shape[2]
        zero = jnp.zeros((1, tdim), f32)

        def body(r, carry):
            a_hr1, a_hr2, a_hd1, a_hd2 = carry
            i1 = idx1_ref[r]
            i2 = idx2_ref[r]
            h1 = hrf1_ref[r].astype(f32)          # (1, T) — read once per row
            h2 = hrf2_ref[r].astype(f32)
            a_hr1 = a_hr1 + jnp.abs(h1 - gt_ref[i1].astype(f32))
            a_hr2 = a_hr2 + jnp.abs(h2 - gt_ref[i2].astype(f32))
            a_hd1 = a_hd1 + jnp.abs(h1 - hr_ref[i1].astype(f32))
            a_hd2 = a_hd2 + jnp.abs(h2 - hr_ref[i2].astype(f32))
            return a_hr1, a_hr2, a_hd1, a_hd2

        a_hr1, a_hr2, a_hd1, a_hd2 = lax.fori_loop(
            0, nsub, body, (zero, zero, zero, zero), unroll=nsub <= 8)

        out_ref[0, 0] = jnp.sum(a_hr1)
        out_ref[0, 1] = jnp.sum(a_hr2)
        out_ref[0, 2] = jnp.sum(acc_fhr1[...])
        out_ref[0, 3] = jnp.sum(acc_fhr2[...])
        out_ref[0, 4] = jnp.sum(acc_fn1[...])
        out_ref[0, 5] = jnp.sum(acc_fn2[...])
        out_ref[0, 6] = jnp.sum(a_hd1)
        out_ref[0, 7] = jnp.sum(a_hd2)


def cross_loss(feat_hr, feat_n, hr,
               feat_hrf1, feat_nf1, hrf1, idx1,
               feat_hrf2, feat_nf2, hrf2, idx2, gt,
               lambda_cross_fhr=5e-06, lambda_cross_fn=5e-06, lambda_cross_hr=1.0):
    """Exact forward semantics of Cross_loss (all nn.L1Loss, 'mean' reduction)."""
    bsub = int(hrf1.shape[0])
    bfull = int(gt.shape[0])
    T = int(gt.shape[1])

    flat = 1
    for s in feat_hr.shape[1:]:
        flat *= int(s)
    # Pad flat to a multiple of 8*128 so feature blocks are fully (8,128)-aligned.
    flat_pad = -(-flat // (_SUBLANE * _LANE)) * (_SUBLANE * _LANE)
    lfull = flat_pad // _SUBLANE
    ltile = _pick_tile_lanes(lfull)
    n_t = lfull // ltile

    def fold(x):
        b = int(x.shape[0])
        x2 = x.reshape(b, flat)
        if flat_pad != flat:
            # Zero-pad both subset & full tensors -> |0-0| adds nothing to sums.
            x2 = jnp.pad(x2, ((0, 0), (0, flat_pad - flat)))
        return x2.reshape(b, _SUBLANE, lfull)

    fhr3 = fold(feat_hr)
    fn3 = fold(feat_n)
    fhrf1_3 = fold(feat_hrf1)
    fhrf2_3 = fold(feat_hrf2)
    fnf1_3 = fold(feat_nf1)
    fnf2_3 = fold(feat_nf2)

    gt3 = gt.reshape(bfull, 1, T)
    hr3 = hr.reshape(bfull, 1, T)
    hrf1_3 = hrf1.reshape(bsub, 1, T)
    hrf2_3 = hrf2.reshape(bsub, 1, T)

    # Clamp so gathered block indices / in-kernel dynamic reads can't go OOB.
    idx1 = jnp.clip(idx1.astype(jnp.int32), 0, bfull - 1)
    idx2 = jnp.clip(idx2.astype(jnp.int32), 0, bfull - 1)

    feat_blk = (1, _SUBLANE, ltile)

    # index_maps receive (j, t, idx1_ref, idx2_ref) — prefetch refs positional.
    sub_map = lambda j, t, i1, i2: (j, 0, t)         # subset row j, tile t
    g1_map = lambda j, t, i1, i2: (i1[j], 0, t)      # full row idx1[j], tile t
    g2_map = lambda j, t, i1, i2: (i2[j], 0, t)      # full row idx2[j], tile t
    const_map = lambda j, t, i1, i2: (0, 0, 0)       # whole array, DMA'd once

    feat_bytes = jnp.dtype(feat_hr.dtype).itemsize
    hr_bytes = jnp.dtype(gt.dtype).itemsize
    cost = pl.CostEstimate(
        flops=3 * 4 * bsub * flat_pad + 4 * 4 * bsub * T,
        transcendentals=0,
        bytes_accessed=(8 * bsub * flat_pad * feat_bytes
                        + (2 * bfull + 2 * bsub) * T * hr_bytes + 8 * 4),
    )

    sums = pl.pallas_call(
        _fused_cross_loss_kernel,
        out_shape=jax.ShapeDtypeStruct((1, 8), jnp.float32),
        grid_spec=pltpu.PrefetchScalarGridSpec(
            num_scalar_prefetch=2,
            grid=(bsub, n_t),
            in_specs=[
                pl.BlockSpec(feat_blk, sub_map),     # feat_hrf1
                pl.BlockSpec(feat_blk, sub_map),     # feat_hrf2
                pl.BlockSpec(feat_blk, sub_map),     # feat_nf1
                pl.BlockSpec(feat_blk, sub_map),     # feat_nf2
                # TODO(synk): once validated, add pipeline_mode=pl.Buffered(3)
                # on the 4 gathered streams to hide data-dependent DMA latency.
                pl.BlockSpec(feat_blk, g1_map),      # feat_hr gathered by idx1
                pl.BlockSpec(feat_blk, g2_map),      # feat_hr gathered by idx2
                pl.BlockSpec(feat_blk, g1_map),      # feat_n gathered by idx1
                pl.BlockSpec(feat_blk, g2_map),      # feat_n gathered by idx2
                pl.BlockSpec((bsub, 1, T), const_map),   # hrf1  (resident)
                pl.BlockSpec((bsub, 1, T), const_map),   # hrf2  (resident)
                pl.BlockSpec((bfull, 1, T), const_map),  # gt    (resident)
                pl.BlockSpec((bfull, 1, T), const_map),  # hr    (resident)
            ],
            out_specs=pl.BlockSpec(memory_space=pltpu.MemorySpace.SMEM),
            scratch_shapes=[
                pltpu.VMEM((1, _SUBLANE, ltile), jnp.float32),  # acc_fhr1
                pltpu.VMEM((1, _SUBLANE, ltile), jnp.float32),  # acc_fhr2
                pltpu.VMEM((1, _SUBLANE, ltile), jnp.float32),  # acc_fn1
                pltpu.VMEM((1, _SUBLANE, ltile), jnp.float32),  # acc_fn2
            ],
        ),
        # TODO(synk): on v7x, split bsub across the 2 TensorCores with a leading
        # "parallel" axis and a (2, 8) per-core partial-sum output combined in
        # the wrapper; single-TC chips (v5e/v6e) gain nothing from it.
        compiler_params=pltpu.CompilerParams(
            dimension_semantics=("arbitrary", "arbitrary")),
        cost_estimate=cost,
    )(idx1, idx2,
      fhrf1_3, fhrf2_3, fnf1_3, fnf2_3,
      fhr3, fhr3, fn3, fn3,
      hrf1_3, hrf2_3, gt3, hr3)

    denom_hr = jnp.float32(bsub * T)
    denom_f = jnp.float32(bsub * flat)

    loss_hr1 = sums[0, 0] / denom_hr
    loss_hr2 = sums[0, 1] / denom_hr
    loss_fhr1 = sums[0, 2] / denom_f
    loss_fhr2 = sums[0, 3] / denom_f
    loss_fn1 = sums[0, 4] / denom_f
    loss_fn2 = sums[0, 5] / denom_f
    loss_hr_dis1 = sums[0, 6] / denom_hr
    loss_hr_dis2 = sums[0, 7] / denom_hr

    loss = (lambda_cross_hr * (loss_hr1 + loss_hr2) / 2
            + lambda_cross_fhr * (loss_fhr1 + loss_fhr2) / 2
            + lambda_cross_fn * (loss_fn1 + loss_fn2) / 2)
    return (loss, loss_hr1, loss_hr2, loss_fhr1, loss_fhr2,
            loss_fn1, loss_fn2, loss_hr_dis1, loss_hr_dis2)


if __name__ == "__main__":
    key = jax.random.PRNGKey(0)
    B, C, H, W, T = 4, 4, 16, 16, 128   # full batch, feat channels/spatial, HR length
    Bsub = 2                            # size of the idx1 / idx2 subsets

    ks = jax.random.split(key, 10)
    feat_hr = jax.random.normal(ks[0], (B, C, H, W), jnp.float32)
    feat_n = jax.random.normal(ks[1], (B, C, H, W), jnp.float32)
    hr = jax.random.normal(ks[2], (B, T), jnp.float32)
    gt = jax.random.normal(ks[3], (B, T), jnp.float32)
    feat_hrf1 = jax.random.normal(ks[4], (Bsub, C, H, W), jnp.float32)
    feat_nf1 = jax.random.normal(ks[5], (Bsub, C, H, W), jnp.float32)
    hrf1 = jax.random.normal(ks[6], (Bsub, T), jnp.float32)
    feat_hrf2 = jax.random.normal(ks[7], (Bsub, C, H, W), jnp.float32)
    feat_nf2 = jax.random.normal(ks[8], (Bsub, C, H, W), jnp.float32)
    hrf2 = jax.random.normal(ks[9], (Bsub, T), jnp.float32)
    idx1 = jnp.array([0, 2], dtype=jnp.int32)
    idx2 = jnp.array([1, 3], dtype=jnp.int32)

    out = jax.jit(cross_loss)(feat_hr, feat_n, hr,
                              feat_hrf1, feat_nf1, hrf1, idx1,
                              feat_hrf2, feat_nf2, hrf2, idx2, gt)
    out = jax.block_until_ready(out)

    # pure-JAX reference for correctness
    def l1(a, b):
        return jnp.mean(jnp.abs(a - b))

    ref = (
        l1(hrf1, gt[idx1]), l1(hrf2, gt[idx2]),
        l1(feat_hrf1, feat_hr[idx1]), l1(feat_hrf2, feat_hr[idx2]),
        l1(feat_nf1, feat_n[idx1]), l1(feat_nf2, feat_n[idx2]),
        l1(hrf1, hr[idx1]), l1(hrf2, hr[idx2]),
    )
    ref_loss = (1.0 * (ref[0] + ref[1]) / 2
                + 5e-06 * (ref[2] + ref[3]) / 2
                + 5e-06 * (ref[4] + ref[5]) / 2)
    ref_all = (ref_loss,) + ref

    for got, want in zip(out, ref_all):
        assert jnp.allclose(got, want, rtol=1e-5, atol=1e-5), (got, want)

    print("KERNEL_OK")
</pallas_src>

<mosaic_0001>
module attributes {stable_mosaic.version = 11 : i64} {
  func.func @_fused_cross_loss_kernel(%arg0: i32, %arg1: i32, %arg2: memref<2xi32, #tpu.memory_space<smem>>, %arg3: memref<2xi32, #tpu.memory_space<smem>>, %arg4: memref<1x8x128xf32, #tpu.memory_space<vmem>>, %arg5: memref<1x8x128xf32, #tpu.memory_space<vmem>>, %arg6: memref<1x8x128xf32, #tpu.memory_space<vmem>>, %arg7: memref<1x8x128xf32, #tpu.memory_space<vmem>>, %arg8: memref<1x8x128xf32, #tpu.memory_space<vmem>>, %arg9: memref<1x8x128xf32, #tpu.memory_space<vmem>>, %arg10: memref<1x8x128xf32, #tpu.memory_space<vmem>>, %arg11: memref<1x8x128xf32, #tpu.memory_space<vmem>>, %arg12: memref<2x1x128xf32, #tpu.memory_space<vmem>>, %arg13: memref<2x1x128xf32, #tpu.memory_space<vmem>>, %arg14: memref<4x1x128xf32, #tpu.memory_space<vmem>>, %arg15: memref<4x1x128xf32, #tpu.memory_space<vmem>>, %arg16: memref<1x8xf32, #tpu.memory_space<smem>>, %arg17: memref<1x8x128xf32, #tpu.memory_space<vmem>>, %arg18: memref<1x8x128xf32, #tpu.memory_space<vmem>>, %arg19: memref<1x8x128xf32, #tpu.memory_space<vmem>>, %arg20: memref<1x8x128xf32, #tpu.memory_space<vmem>>) attributes {dimension_semantics = [#tpu.dimension_semantics<arbitrary>, #tpu.dimension_semantics<arbitrary>], iteration_bounds = array<i64: 2, 1>, scalar_prefetch = 2 : i64, scratch_operands = 4 : i64, tpu.core_type = #tpu.core_type<tc>, window_params = [{transform_indices = @transform_0, window_bounds = array<i64: 1, 8, 128>}, {transform_indices = @transform_1, window_bounds = array<i64: 1, 8, 128>}, {transform_indices = @transform_2, window_bounds = array<i64: 1, 8, 128>}, {transform_indices = @transform_3, window_bounds = array<i64: 1, 8, 128>}, {transform_indices = @transform_4, window_bounds = array<i64: 1, 8, 128>}, {transform_indices = @transform_5, window_bounds = array<i64: 1, 8, 128>}, {transform_indices = @transform_6, window_bounds = array<i64: 1, 8, 128>}, {transform_indices = @transform_7, window_bounds = array<i64: 1, 8, 128>}, {pipeline_mode = #tpu.pipeline_mode<synchronous>, transform_indices = @transform_8, window_bounds = array<i64: 2, 1, 128>}, {pipeline_mode = #tpu.pipeline_mode<synchronous>, transform_indices = @transform_9, window_bounds = array<i64: 2, 1, 128>}, {pipeline_mode = #tpu.pipeline_mode<synchronous>, transform_indices = @transform_10, window_bounds = array<i64: 4, 1, 128>}, {pipeline_mode = #tpu.pipeline_mode<synchronous>, transform_indices = @transform_11, window_bounds = array<i64: 4, 1, 128>}, {transform_indices = @transform_12, window_bounds = array<i64: 1, 8>}]} {
    %c0_i32 = arith.constant 0 : i32
    %0 = arith.cmpi eq, %arg0, %c0_i32 : i32
    %c0_i32_0 = arith.constant 0 : i32
    %1 = arith.cmpi eq, %arg1, %c0_i32_0 : i32
    %2 = arith.andi %0, %1 : i1
    %c1_i32 = arith.constant 1 : i32
    %3 = arith.cmpi eq, %arg0, %c1_i32 : i32
    %c0_i32_1 = arith.constant 0 : i32
    %4 = arith.cmpi eq, %arg1, %c0_i32_1 : i32
    %5 = arith.andi %3, %4 : i1
    %6 = arith.extui %2 : i1 to i32
    %c0_i32_2 = arith.constant 0 : i32
    %7 = arith.cmpi ne, %6, %c0_i32_2 : i32
    scf.if %7 {
      %cst = arith.constant 0.000000e+00 : f32
      %38 = vector.broadcast %cst : f32 to vector<1x8x128xf32>
      %c0_51 = arith.constant 0 : index
      %c0_52 = arith.constant 0 : index
      %c0_53 = arith.constant 0 : index
      %39 = vector.load %arg17[%c0_51, %c0_52, %c0_53] : memref<1x8x128xf32, #tpu.memory_space<vmem>>, vector<1x8x128xf32>
      tpu.vector_store %arg17[%c0_51, %c0_52, %c0_53], %38 {strides = array<i32>} : memref<1x8x128xf32, #tpu.memory_space<vmem>>, vector<1x8x128xf32>,
      %cst_54 = arith.constant 0.000000e+00 : f32
      %40 = vector.broadcast %cst_54 : f32 to vector<1x8x128xf32>
      %c0_55 = arith.constant 0 : index
      %c0_56 = arith.constant 0 : index
      %c0_57 = arith.constant 0 : index
      %41 = vector.load %arg18[%c0_55, %c0_56, %c0_57] : memref<1x8x128xf32, #tpu.memory_space<vmem>>, vector<1x8x128xf32>
      tpu.vector_store %arg18[%c0_55, %c0_56, %c0_57], %40 {strides = array<i32>} : memref<1x8x128xf32, #tpu.memory_space<vmem>>, vector<1x8x128xf32>,
      %cst_58 = arith.constant 0.000000e+00 : f32
      %42 = vector.broadcast %cst_58 : f32 to vector<1x8x128xf32>
      %c0_59 = arith.constant 0 : index
      %c0_60 = arith.constant 0 : index
      %c0_61 = arith.constant 0 : index
      %43 = vector.load %arg19[%c0_59, %c0_60, %c0_61] : memref<1x8x128xf32, #tpu.memory_space<vmem>>, vector<1x8x128xf32>
      tpu.vector_store %arg19[%c0_59, %c0_60, %c0_61], %42 {strides = array<i32>} : memref<1x8x128xf32, #tpu.memory_space<vmem>>, vector<1x8x128xf32>,
      %cst_62 = arith.constant 0.000000e+00 : f32
      %44 = vector.broadcast %cst_62 : f32 to vector<1x8x128xf32>
      %c0_63 = arith.constant 0 : index
      %c0_64 = arith.constant 0 : index
      %c0_65 = arith.constant 0 : index
      %45 = vector.load %arg20[%c0_63, %c0_64, %c0_65] : memref<1x8x128xf32, #tpu.memory_space<vmem>>, vector<1x8x128xf32>
      tpu.vector_store %arg20[%c0_63, %c0_64, %c0_65], %44 {strides = array<i32>} : memref<1x8x128xf32, #tpu.memory_space<vmem>>, vector<1x8x128xf32>,
    } else {
    }
    %c0 = arith.constant 0 : index
    %c0_3 = arith.constant 0 : index
    %c0_4 = arith.constant 0 : index
    %8 = vector.load %arg17[%c0, %c0_3, %c0_4] : memref<1x8x128xf32, #tpu.memory_space<vmem>>, vector<1x8x128xf32>
    %c0_5 = arith.constant 0 : index
    %c0_6 = arith.constant 0 : index
    %c0_7 = arith.constant 0 : index
    %9 = vector.load %arg4[%c0_5, %c0_6, %c0_7] : memref<1x8x128xf32, #tpu.memory_space<vmem>>, vector<1x8x128xf32>
    %c0_8 = arith.constant 0 : index
    %c0_9 = arith.constant 0 : index
    %c0_10 = arith.constant 0 : index
    %10 = vector.load %arg8[%c0_8, %c0_9, %c0_10] : memref<1x8x128xf32, #tpu.memory_space<vmem>>, vector<1x8x128xf32>
    %11 = arith.subf %9, %10 : vector<1x8x128xf32>
    %12 = math.absf %11 : vector<1x8x128xf32>
    %13 = arith.addf %8, %12 : vector<1x8x128xf32>
    %c0_11 = arith.constant 0 : index
    %c0_12 = arith.constant 0 : index
    %c0_13 = arith.constant 0 : index
    %14 = vector.load %arg17[%c0_11, %c0_12, %c0_13] : memref<1x8x128xf32, #tpu.memory_space<vmem>>, vector<1x8x128xf32>
    tpu.vector_store %arg17[%c0_11, %c0_12, %c0_13], %13 {strides = array<i32>} : memref<1x8x128xf32, #tpu.memory_space<vmem>>, vector<1x8x128xf32>,
    %c0_14 = arith.constant 0 : index
    %c0_15 = arith.constant 0 : index
    %c0_16 = arith.constant 0 : index
    %15 = vector.load %arg18[%c0_14, %c0_15, %c0_16] : memref<1x8x128xf32, #tpu.memory_space<vmem>>, vector<1x8x128xf32>
    %c0_17 = arith.constant 0 : index
    %c0_18 = arith.constant 0 : index
    %c0_19 = arith.constant 0 : index
    %16 = vector.load %arg5[%c0_17, %c0_18, %c0_19] : memref<1x8x128xf32, #tpu.memory_space<vmem>>, vector<1x8x128xf32>
    %c0_20 = arith.constant 0 : index
    %c0_21 = arith.constant 0 : index
    %c0_22 = arith.constant 0 : index
    %17 = vector.load %arg9[%c0_20, %c0_21, %c0_22] : memref<1x8x128xf32, #tpu.memory_space<vmem>>, vector<1x8x128xf32>
    %18 = arith.subf %16, %17 : vector<1x8x128xf32>
    %19 = math.absf %18 : vector<1x8x128xf32>
    %20 = arith.addf %15, %19 : vector<1x8x128xf32>
    %c0_23 = arith.constant 0 : index
    %c0_24 = arith.constant 0 : index
    %c0_25 = arith.constant 0 : index
    %21 = vector.load %arg18[%c0_23, %c0_24, %c0_25] : memref<1x8x128xf32, #tpu.memory_space<vmem>>, vector<1x8x128xf32>
    tpu.vector_store %arg18[%c0_23, %c0_24, %c0_25], %20 {strides = array<i32>} : memref<1x8x128xf32, #tpu.memory_space<vmem>>, vector<1x8x128xf32>,
    %c0_26 = arith.constant 0 : index
    %c0_27 = arith.constant 0 : index
    %c0_28 = arith.constant 0 : index
    %22 = vector.load %arg19[%c0_26, %c0_27, %c0_28] : memref<1x8x128xf32, #tpu.memory_space<vmem>>, vector<1x8x128xf32>
    %c0_29 = arith.constant 0 : index
    %c0_30 = arith.constant 0 : index
    %c0_31 = arith.constant 0 : index
    %23 = vector.load %arg6[%c0_29, %c0_30, %c0_31] : memref<1x8x128xf32, #tpu.memory_space<vmem>>, vector<1x8x128xf32>
    %c0_32 = arith.constant 0 : index
    %c0_33 = arith.constant 0 : index
    %c0_34 = arith.constant 0 : index
    %24 = vector.load %arg10[%c0_32, %c0_33, %c0_34] : memref<1x8x128xf32, #tpu.memory_space<vmem>>, vector<1x8x128xf32>
    %25 = arith.subf %23, %24 : vector<1x8x128xf32>
    %26 = math.absf %25 : vector<1x8x128xf32>
    %27 = arith.addf %22, %26 : vector<1x8x128xf32>
    %c0_35 = arith.constant 0 : index
    %c0_36 = arith.constant 0 : index
    %c0_37 = arith.constant 0 : index
    %28 = vector.load %arg19[%c0_35, %c0_36, %c0_37] : memref<1x8x128xf32, #tpu.memory_space<vmem>>, vector<1x8x128xf32>
    tpu.vector_store %arg19[%c0_35, %c0_36, %c0_37], %27 {strides = array<i32>} : memref<1x8x128xf32, #tpu.memory_space<vmem>>, vector<1x8x128xf32>,
    %c0_38 = arith.constant 0 : index
    %c0_39 = arith.constant 0 : index
    %c0_40 = arith.constant 0 : index
    %29 = vector.load %arg20[%c0_38, %c0_39, %c0_40] : memref<1x8x128xf32, #tpu.memory_space<vmem>>, vector<1x8x128xf32>
    %c0_41 = arith.constant 0 : index
    %c0_42 = arith.constant 0 : index
    %c0_43 = arith.constant 0 : index
    %30 = vector.load %arg7[%c0_41, %c0_42, %c0_43] : memref<1x8x128xf32, #tpu.memory_space<vmem>>, vector<1x8x128xf32>
    %c0_44 = arith.constant 0 : index
    %c0_45 = arith.constant 0 : index
    %c0_46 = arith.constant 0 : index
    %31 = vector.load %arg11[%c0_44, %c0_45, %c0_46] : memref<1x8x128xf32, #tpu.memory_space<vmem>>, vector<1x8x128xf32>
    %32 = arith.subf %30, %31 : vector<1x8x128xf32>
    %33 = math.absf %32 : vector<1x8x128xf32>
    %34 = arith.addf %29, %33 : vector<1x8x128xf32>
    %c0_47 = arith.constant 0 : index
    %c0_48 = arith.constant 0 : index
    %c0_49 = arith.constant 0 : index
    %35 = vector.load %arg20[%c0_47, %c0_48, %c0_49] : memref<1x8x128xf32, #tpu.memory_space<vmem>>, vector<1x8x128xf32>
    tpu.vector_store %arg20[%c0_47, %c0_48, %c0_49], %34 {strides = array<i32>} : memref<1x8x128xf32, #tpu.memory_space<vmem>>, vector<1x8x128xf32>,
    %36 = arith.extui %5 : i1 to i32
    %c0_i32_50 = arith.constant 0 : i32
    %37 = arith.cmpi ne, %36, %c0_i32_50 : i32
    scf.if %37 {
      %cst = arith.constant 0.000000e+00 : f32
      %38 = vector.broadcast %cst : f32 to vector<1x128xf32>
      %c0_i32_51 = arith.constant 0 : i32
      %39 = arith.index_cast %c0_i32_51 : i32 to index
      %40 = memref.load %arg2[%39] : memref<2xi32, #tpu.memory_space<smem>>
      %41 = arith.index_cast %c0_i32_51 : i32 to index
      %42 = memref.load %arg3[%41] : memref<2xi32, #tpu.memory_space<smem>>
      %43 = arith.index_cast %c0_i32_51 : i32 to index
      %c0_52 = arith.constant 0 : index
      %c0_53 = arith.constant 0 : index
      %44 = vector.load %arg12[%43, %c0_52, %c0_53] : memref<2x1x128xf32, #tpu.memory_space<vmem>>, vector<1x1x128xf32>
      %45 = vector.shape_cast %44 : vector<1x1x128xf32> to vector<1x128xf32>
      %46 = arith.index_cast %c0_i32_51 : i32 to index
      %c0_54 = arith.constant 0 : index
      %c0_55 = arith.constant 0 : index
      %47 = vector.load %arg13[%46, %c0_54, %c0_55] : memref<2x1x128xf32, #tpu.memory_space<vmem>>, vector<1x1x128xf32>
      %48 = vector.shape_cast %47 : vector<1x1x128xf32> to vector<1x128xf32>
      %49 = arith.index_cast %40 : i32 to index
      %c0_56 = arith.constant 0 : index
      %c0_57 = arith.constant 0 : index
      %50 = vector.load %arg14[%49, %c0_56, %c0_57] : memref<4x1x128xf32, #tpu.memory_space<vmem>>, vector<1x1x128xf32>
      %51 = vector.shape_cast %50 : vector<1x1x128xf32> to vector<1x128xf32>
      %52 = arith.subf %45, %51 : vector<1x128xf32>
      %53 = math.absf %52 : vector<1x128xf32>
      %54 = arith.addf %38, %53 : vector<1x128xf32>
      %55 = arith.index_cast %42 : i32 to index
      %c0_58 = arith.constant 0 : index
      %c0_59 = arith.constant 0 : index
      %56 = vector.load %arg14[%55, %c0_58, %c0_59] : memref<4x1x128xf32, #tpu.memory_space<vmem>>, vector<1x1x128xf32>
      %57 = vector.shape_cast %56 : vector<1x1x128xf32> to vector<1x128xf32>
      %58 = arith.subf %48, %57 : vector<1x128xf32>
      %59 = math.absf %58 : vector<1x128xf32>
      %60 = arith.addf %38, %59 : vector<1x128xf32>
      %61 = arith.index_cast %40 : i32 to index
      %c0_60 = arith.constant 0 : index
      %c0_61 = arith.constant 0 : index
      %62 = vector.load %arg15[%61, %c0_60, %c0_61] : memref<4x1x128xf32, #tpu.memory_space<vmem>>, vector<1x1x128xf32>
      %63 = vector.shape_cast %62 : vector<1x1x128xf32> to vector<1x128xf32>
      %64 = arith.subf %45, %63 : vector<1x128xf32>
      %65 = math.absf %64 : vector<1x128xf32>
      %66 = arith.addf %38, %65 : vector<1x128xf32>
      %67 = arith.index_cast %42 : i32 to index
      %c0_62 = arith.constant 0 : index
      %c0_63 = arith.constant 0 : index
      %68 = vector.load %arg15[%67, %c0_62, %c0_63] : memref<4x1x128xf32, #tpu.memory_space<vmem>>, vector<1x1x128xf32>
      %69 = vector.shape_cast %68 : vector<1x1x128xf32> to vector<1x128xf32>
      %70 = arith.subf %48, %69 : vector<1x128xf32>
      %71 = math.absf %70 : vector<1x128xf32>
      %72 = arith.addf %38, %71 : vector<1x128xf32>
      %c1_i32_64 = arith.constant 1 : i32
      %73 = arith.index_cast %c1_i32_64 : i32 to index
      %74 = memref.load %arg2[%73] : memref<2xi32, #tpu.memory_space<smem>>
      %75 = arith.index_cast %c1_i32_64 : i32 to index
      %76 = memref.load %arg3[%75] : memref<2xi32, #tpu.memory_space<smem>>
      %77 = arith.index_cast %c1_i32_64 : i32 to index
      %c0_65 = arith.constant 0 : index
      %c0_66 = arith.constant 0 : index
      %78 = vector.load %arg12[%77, %c0_65, %c0_66] : memref<2x1x128xf32, #tpu.memory_space<vmem>>, vector<1x1x128xf32>
      %79 = vector.shape_cast %78 : vector<1x1x128xf32> to vector<1x128xf32>
      %80 = arith.index_cast %c1_i32_64 : i32 to index
      %c0_67 = arith.constant 0 : index
      %c0_68 = arith.constant 0 : index
      %81 = vector.load %arg13[%80, %c0_67, %c0_68] : memref<2x1x128xf32, #tpu.memory_space<vmem>>, vector<1x1x128xf32>
      %82 = vector.shape_cast %81 : vector<1x1x128xf32> to vector<1x128xf32>
      %83 = arith.index_cast %74 : i32 to index
      %c0_69 = arith.constant 0 : index
      %c0_70 = arith.constant 0 : index
      %84 = vector.load %arg14[%83, %c0_69, %c0_70] : memref<4x1x128xf32, #tpu.memory_space<vmem>>, vector<1x1x128xf32>
      %85 = vector.shape_cast %84 : vector<1x1x128xf32> to vector<1x128xf32>
      %86 = arith.subf %79, %85 : vector<1x128xf32>
      %87 = math.absf %86 : vector<1x128xf32>
      %88 = arith.addf %54, %87 : vector<1x128xf32>
      %89 = arith.index_cast %76 : i32 to index
      %c0_71 = arith.constant 0 : index
      %c0_72 = arith.constant 0 : index
      %90 = vector.load %arg14[%89, %c0_71, %c0_72] : memref<4x1x128xf32, #tpu.memory_space<vmem>>, vector<1x1x128xf32>
      %91 = vector.shape_cast %90 : vector<1x1x128xf32> to vector<1x128xf32>
      %92 = arith.subf %82, %91 : vector<1x128xf32>
      %93 = math.absf %92 : vector<1x128xf32>
      %94 = arith.addf %60, %93 : vector<1x128xf32>
      %95 = arith.index_cast %74 : i32 to index
      %c0_73 = arith.constant 0 : index
      %c0_74 = arith.constant 0 : index
      %96 = vector.load %arg15[%95, %c0_73, %c0_74] : memref<4x1x128xf32, #tpu.memory_space<vmem>>, vector<1x1x128xf32>
      %97 = vector.shape_cast %96 : vector<1x1x128xf32> to vector<1x128xf32>
      %98 = arith.subf %79, %97 : vector<1x128xf32>
      %99 = math.absf %98 : vector<1x128xf32>
      %100 = arith.addf %66, %99 : vector<1x128xf32>
      %101 = arith.index_cast %76 : i32 to index
      %c0_75 = arith.constant 0 : index
      %c0_76 = arith.constant 0 : index
      %102 = vector.load %arg15[%101, %c0_75, %c0_76] : memref<4x1x128xf32, #tpu.memory_space<vmem>>, vector<1x1x128xf32>
      %103 = vector.shape_cast %102 : vector<1x1x128xf32> to vector<1x128xf32>
      %104 = arith.subf %82, %103 : vector<1x128xf32>
      %105 = math.absf %104 : vector<1x128xf32>
      %106 = arith.addf %72, %105 : vector<1x128xf32>
      %c2_i32 = arith.constant 2 : i32
      %107 = vector.shape_cast %88 : vector<1x128xf32> to vector<1x1x128xf32>
      %cst_77 = arith.constant dense<0.000000e+00> : vector<1xf32>
      %108 = vector.multi_reduction <add>, %107, %cst_77 [1, 2] : vector<1x1x128xf32> to vector<1xf32>
      %109 = vector.shape_cast %108 : vector<1xf32> to vector<1x1x1xf32>
      %110 = vector.extract %109[0, 0, 0] : f32 from vector<1x1x1xf32>
      %c0_78 = arith.constant 0 : index
      %c0_79 = arith.constant 0 : index
      %111 = memref.load %arg16[%c0_78, %c0_79] : memref<1x8xf32, #tpu.memory_space<smem>>
      memref.store %110, %arg16[%c0_78, %c0_79] : memref<1x8xf32, #tpu.memory_space<smem>>
      %112 = vector.shape_cast %94 : vector<1x128xf32> to vector<1x1x128xf32>
      %cst_80 = arith.constant dense<0.000000e+00> : vector<1xf32>
      %113 = vector.multi_reduction <add>, %112, %cst_80 [1, 2] : vector<1x1x128xf32> to vector<1xf32>
      %114 = vector.shape_cast %113 : vector<1xf32> to vector<1x1x1xf32>
      %115 = vector.extract %114[0, 0, 0] : f32 from vector<1x1x1xf32>
      %c0_81 = arith.constant 0 : index
      %c1 = arith.constant 1 : index
      %116 = memref.load %arg16[%c0_81, %c1] : memref<1x8xf32, #tpu.memory_space<smem>>
      memref.store %115, %arg16[%c0_81, %c1] : memref<1x8xf32, #tpu.memory_space<smem>>
      %c0_82 = arith.constant 0 : index
      %c0_83 = arith.constant 0 : index
      %c0_84 = arith.constant 0 : index
      %117 = vector.load %arg17[%c0_82, %c0_83, %c0_84] : memref<1x8x128xf32, #tpu.memory_space<vmem>>, vector<1x8x128xf32>
      %118 = vector.shape_cast %117 : vector<1x8x128xf32> to vector<1x1x8x128xf32>
      %cst_85 = arith.constant dense<0.000000e+00> : vector<1xf32>
      %119 = vector.multi_reduction <add>, %118, %cst_85 [1, 2, 3] : vector<1x1x8x128xf32> to vector<1xf32>
      %120 = vector.shape_cast %119 : vector<1xf32> to vector<1x1x1x1xf32>
      %121 = vector.extract %120[0, 0, 0, 0] : f32 from vector<1x1x1x1xf32>
      %c0_86 = arith.constant 0 : index
      %c2 = arith.constant 2 : index
      %122 = memref.load %arg16[%c0_86, %c2] : memref<1x8xf32, #tpu.memory_space<smem>>
      memref.store %121, %arg16[%c0_86, %c2] : memref<1x8xf32, #tpu.memory_space<smem>>
      %c0_87 = arith.constant 0 : index
      %c0_88 = arith.constant 0 : index
      %c0_89 = arith.constant 0 : index
      %123 = vector.load %arg18[%c0_87, %c0_88, %c0_89] : memref<1x8x128xf32, #tpu.memory_space<vmem>>, vector<1x8x128xf32>
      %124 = vector.shape_cast %123 : vector<1x8x128xf32> to vector<1x1x8x128xf32>
      %cst_90 = arith.constant dense<0.000000e+00> : vector<1xf32>
      %125 = vector.multi_reduction <add>, %124, %cst_90 [1, 2, 3] : vector<1x1x8x128xf32> to vector<1xf32>
      %126 = vector.shape_cast %125 : vector<1xf32> to vector<1x1x1x1xf32>
      %127 = vector.extract %126[0, 0, 0, 0] : f32 from vector<1x1x1x1xf32>
      %c0_91 = arith.constant 0 : index
      %c3 = arith.constant 3 : index
      %128 = memref.load %arg16[%c0_91, %c3] : memref<1x8xf32, #tpu.memory_space<smem>>
      memref.store %127, %arg16[%c0_91, %c3] : memref<1x8xf32, #tpu.memory_space<smem>>
      %c0_92 = arith.constant 0 : index
      %c0_93 = arith.constant 0 : index
      %c0_94 = arith.constant 0 : index
      %129 = vector.load %arg19[%c0_92, %c0_93, %c0_94] : memref<1x8x128xf32, #tpu.memory_space<vmem>>, vector<1x8x128xf32>
      %130 = vector.shape_cast %129 : vector<1x8x128xf32> to vector<1x1x8x128xf32>
      %cst_95 = arith.constant dense<0.000000e+00> : vector<1xf32>
      %131 = vector.multi_reduction <add>, %130, %cst_95 [1, 2, 3] : vector<1x1x8x128xf32> to vector<1xf32>
      %132 = vector.shape_cast %131 : vector<1xf32> to vector<1x1x1x1xf32>
      %133 = vector.extract %132[0, 0, 0, 0] : f32 from vector<1x1x1x1xf32>
      %c0_96 = arith.constant 0 : index
      %c4 = arith.constant 4 : index
      %134 = memref.load %arg16[%c0_96, %c4] : memref<1x8xf32, #tpu.memory_space<smem>>
      memref.store %133, %arg16[%c0_96, %c4] : memref<1x8xf32, #tpu.memory_space<smem>>
      %c0_97 = arith.constant 0 : index
      %c0_98 = arith.constant 0 : index
      %c0_99 = arith.constant 0 : index
      %135 = vector.load %arg20[%c0_97, %c0_98, %c0_99] : memref<1x8x128xf32, #tpu.memory_space<vmem>>, vector<1x8x128xf32>
      %136 = vector.shape_cast %135 : vector<1x8x128xf32> to vector<1x1x8x128xf32>
      %cst_100 = arith.constant dense<0.000000e+00> : vector<1xf32>
      %137 = vector.multi_reduction <add>, %136, %cst_100 [1, 2, 3] : vector<1x1x8x128xf32> to vector<1xf32>
      %138 = vector.shape_cast %137 : vector<1xf32> to vector<1x1x1x1xf32>
      %139 = vector.extract %138[0, 0, 0, 0] : f32 from vector<1x1x1x1xf32>
      %c0_101 = arith.constant 0 : index
      %c5 = arith.constant 5 : index
      %140 = memref.load %arg16[%c0_101, %c5] : memref<1x8xf32, #tpu.memory_space<smem>>
      memref.store %139, %arg16[%c0_101, %c5] : memref<1x8xf32, #tpu.memory_space<smem>>
      %141 = vector.shape_cast %100 : vector<1x128xf32> to vector<1x1x128xf32>
      %cst_102 = arith.constant dense<0.000000e+00> : vector<1xf32>
      %142 = vector.multi_reduction <add>, %141, %cst_102 [1, 2] : vector<1x1x128xf32> to vector<1xf32>
      %143 = vector.shape_cast %142 : vector<1xf32> to vector<1x1x1xf32>
      %144 = vector.extract %143[0, 0, 0] : f32 from vector<1x1x1xf32>
      %c0_103 = arith.constant 0 : index
      %c6 = arith.constant 6 : index
      %145 = memref.load %arg16[%c0_103, %c6] : memref<1x8xf32, #tpu.memory_space<smem>>
      memref.store %144, %arg16[%c0_103, %c6] : memref<1x8xf32, #tpu.memory_space<smem>>
      %146 = vector.shape_cast %106 : vector<1x128xf32> to vector<1x1x128xf32>
      %cst_104 = arith.constant dense<0.000000e+00> : vector<1xf32>
      %147 = vector.multi_reduction <add>, %146, %cst_104 [1, 2] : vector<1x1x128xf32> to vector<1xf32>
      %148 = vector.shape_cast %147 : vector<1xf32> to vector<1x1x1xf32>
      %149 = vector.extract %148[0, 0, 0] : f32 from vector<1x1x1xf32>
      %c0_105 = arith.constant 0 : index
      %c7 = arith.constant 7 : index
      %150 = memref.load %arg16[%c0_105, %c7] : memref<1x8xf32, #tpu.memory_space<smem>>
      memref.store %149, %arg16[%c0_105, %c7] : memref<1x8xf32, #tpu.memory_space<smem>>
    } else {
    }
    return
  }
  func.func @transform_0(%arg0: i32, %arg1: i32, %arg2: memref<2xi32, #tpu.memory_space<smem>>, %arg3: memref<2xi32, #tpu.memory_space<smem>>) -> (i32, i32, i32) {
    %c0_i32 = arith.constant 0 : i32
    %c0_i32_0 = arith.constant 0 : i32
    return %arg0, %c0_i32, %arg1 : i32, i32, i32
  }
  func.func @transform_1(%arg0: i32, %arg1: i32, %arg2: memref<2xi32, #tpu.memory_space<smem>>, %arg3: memref<2xi32, #tpu.memory_space<smem>>) -> (i32, i32, i32) {
    %c0_i32 = arith.constant 0 : i32
    %c0_i32_0 = arith.constant 0 : i32
    return %arg0, %c0_i32, %arg1 : i32, i32, i32
  }
  func.func @transform_2(%arg0: i32, %arg1: i32, %arg2: memref<2xi32, #tpu.memory_space<smem>>, %arg3: memref<2xi32, #tpu.memory_space<smem>>) -> (i32, i32, i32) {
    %c0_i32 = arith.constant 0 : i32
    %c0_i32_0 = arith.constant 0 : i32
    return %arg0, %c0_i32, %arg1 : i32, i32, i32
  }
  func.func @transform_3(%arg0: i32, %arg1: i32, %arg2: memref<2xi32, #tpu.memory_space<smem>>, %arg3: memref<2xi32, #tpu.memory_space<smem>>) -> (i32, i32, i32) {
    %c0_i32 = arith.constant 0 : i32
    %c0_i32_0 = arith.constant 0 : i32
    return %arg0, %c0_i32, %arg1 : i32, i32, i32
  }
  func.func @transform_4(%arg0: i32, %arg1: i32, %arg2: memref<2xi32, #tpu.memory_space<smem>>, %arg3: memref<2xi32, #tpu.memory_space<smem>>) -> (i32, i32, i32) {
    %0 = arith.index_cast %arg0 : i32 to index
    %1 = memref.load %arg2[%0] : memref<2xi32, #tpu.memory_space<smem>>
    %c0_i32 = arith.constant 0 : i32
    %c0_i32_0 = arith.constant 0 : i32
    return %1, %c0_i32, %arg1 : i32, i32, i32
  }
  func.func @transform_5(%arg0: i32, %arg1: i32, %arg2: memref<2xi32, #tpu.memory_space<smem>>, %arg3: memref<2xi32, #tpu.memory_space<smem>>) -> (i32, i32, i32) {
    %0 = arith.index_cast %arg0 : i32 to index
    %1 = memref.load %arg3[%0] : memref<2xi32, #tpu.memory_space<smem>>
    %c0_i32 = arith.constant 0 : i32
    %c0_i32_0 = arith.constant 0 : i32
    return %1, %c0_i32, %arg1 : i32, i32, i32
  }
  func.func @transform_6(%arg0: i32, %arg1: i32, %arg2: memref<2xi32, #tpu.memory_space<smem>>, %arg3: memref<2xi32, #tpu.memory_space<smem>>) -> (i32, i32, i32) {
    %0 = arith.index_cast %arg0 : i32 to index
    %1 = memref.load %arg2[%0] : memref<2xi32, #tpu.memory_space<smem>>
    %c0_i32 = arith.constant 0 : i32
    %c0_i32_0 = arith.constant 0 : i32
    return %1, %c0_i32, %arg1 : i32, i32, i32
  }
  func.func @transform_7(%arg0: i32, %arg1: i32, %arg2: memref<2xi32, #tpu.memory_space<smem>>, %arg3: memref<2xi32, #tpu.memory_space<smem>>) -> (i32, i32, i32) {
    %0 = arith.index_cast %arg0 : i32 to index
    %1 = memref.load %arg3[%0] : memref<2xi32, #tpu.memory_space<smem>>
    %c0_i32 = arith.constant 0 : i32
    %c0_i32_0 = arith.constant 0 : i32
    return %1, %c0_i32, %arg1 : i32, i32, i32
  }
  func.func @transform_8(%arg0: i32, %arg1: i32, %arg2: memref<2xi32, #tpu.memory_space<smem>>, %arg3: memref<2xi32, #tpu.memory_space<smem>>) -> (i32, i32, i32) {
    %c0_i32 = arith.constant 0 : i32
    %c0_i32_0 = arith.constant 0 : i32
    %c0_i32_1 = arith.constant 0 : i32
    %c0_i32_2 = arith.constant 0 : i32
    return %c0_i32, %c0_i32_0, %c0_i32_1 : i32, i32, i32
  }
  func.func @transform_9(%arg0: i32, %arg1: i32, %arg2: memref<2xi32, #tpu.memory_space<smem>>, %arg3: memref<2xi32, #tpu.memory_space<smem>>) -> (i32, i32, i32) {
    %c0_i32 = arith.constant 0 : i32
    %c0_i32_0 = arith.constant 0 : i32
    %c0_i32_1 = arith.constant 0 : i32
    %c0_i32_2 = arith.constant 0 : i32
    return %c0_i32, %c0_i32_0, %c0_i32_1 : i32, i32, i32
  }
  func.func @transform_10(%arg0: i32, %arg1: i32, %arg2: memref<2xi32, #tpu.memory_space<smem>>, %arg3: memref<2xi32, #tpu.memory_space<smem>>) -> (i32, i32, i32) {
    %c0_i32 = arith.constant 0 : i32
    %c0_i32_0 = arith.constant 0 : i32
    %c0_i32_1 = arith.constant 0 : i32
    %c0_i32_2 = arith.constant 0 : i32
    return %c0_i32, %c0_i32_0, %c0_i32_1 : i32, i32, i32
  }
  func.func @transform_11(%arg0: i32, %arg1: i32, %arg2: memref<2xi32, #tpu.memory_space<smem>>, %arg3: memref<2xi32, #tpu.memory_space<smem>>) -> (i32, i32, i32) {
    %c0_i32 = arith.constant 0 : i32
    %c0_i32_0 = arith.constant 0 : i32
    %c0_i32_1 = arith.constant 0 : i32
    %c0_i32_2 = arith.constant 0 : i32
    return %c0_i32, %c0_i32_0, %c0_i32_1 : i32, i32, i32
  }
  func.func @transform_12(%arg0: i32, %arg1: i32, %arg2: memref<2xi32, #tpu.memory_space<smem>>, %arg3: memref<2xi32, #tpu.memory_space<smem>>) -> (i32, i32) {
    %c0_i32 = arith.constant 0 : i32
    %c0_i32_0 = arith.constant 0 : i32
    %c0_i32_1 = arith.constant 0 : i32
    return %c0_i32, %c0_i32_0 : i32, i32
  }
}

</mosaic_0001>

<llo_original>
// kernel: cross_loss.1
$region0: #{cross_loss.1}
  #allocation0 [shape = 'u32[]', space=smem, size = 0x4, offset = 0x4, fixed_abs, tag = 'smem constant byte address 0x4 - core index']
  #allocation1 [shape = 'u32[144,128]{1,0:T(1,128)}', space=vmem, size = 0x12000, scoped, tag = 'internal scratch']
  #allocation2 [shape = 'f32[1,8,128]{2,1,0:T(8,128)}', space=vmem, size = 0x1000, scoped, tag = 'scratch operand']
  #allocation3 [shape = 'f32[1,8,128]{2,1,0:T(8,128)}', space=vmem, size = 0x1000, scoped, tag = 'scratch operand']
  #allocation4 [shape = 'f32[1,8,128]{2,1,0:T(8,128)}', space=vmem, size = 0x1000, scoped, tag = 'scratch operand']
  #allocation5 [shape = 'f32[1,8,128]{2,1,0:T(8,128)}', space=vmem, size = 0x1000, scoped, tag = 'scratch operand']
  #allocation6 [shape = 's32[1]{0}', space=sflag, size = 0x4, scoped, tag = 'scoped memory for cross_loss.1']
  #allocation7 [shape = 'u8[512]{0}', space=smem, size = 0x200, scoped, tag = 'prefetched SMEM operand 0']
  #allocation8 [shape = 'u8[512]{0}', space=smem, size = 0x200, scoped, tag = 'prefetched SMEM operand 1']
  %s0 = inlined_call_operand.vmem [shape: s32[2], index: 0, kind: input, shape index: {}]
  %s1 = inlined_call_operand.vmem [shape: s32[2], index: 1, kind: input, shape index: {}]
  %s2 = inlined_call_operand.vmem [shape: f32[2,8,128], index: 2, kind: input, shape index: {}]
  %s3 = inlined_call_operand.vmem [shape: f32[2,8,128], index: 3, kind: input, shape index: {}]
  %s4 = inlined_call_operand.vmem [shape: f32[2,8,128], index: 4, kind: input, shape index: {}]
  %s5 = inlined_call_operand.vmem [shape: f32[2,8,128], index: 5, kind: input, shape index: {}]
  %s6 = inlined_call_operand.vmem [shape: f32[4,8,128], index: 6, kind: input, shape index: {}, may-alias: {6,7}]
  %s7 = inlined_call_operand.vmem [shape: f32[4,8,128], index: 7, kind: input, shape index: {}, may-alias: {6,7}]
  %s8 = inlined_call_operand.vmem [shape: f32[4,8,128], index: 8, kind: input, shape index: {}, may-alias: {8,9}]
  %s9 = inlined_call_operand.vmem [shape: f32[4,8,128], index: 9, kind: input, shape index: {}, may-alias: {8,9}]
  %s10 = inlined_call_operand.vmem [shape: f32[2,1,128], index: 10, kind: input, shape index: {}]
  %s11 = inlined_call_operand.vmem [shape: f32[2,1,128], index: 11, kind: input, shape index: {}]
  %s12 = inlined_call_operand.vmem [shape: f32[4,1,128], index: 12, kind: input, shape index: {}]
  %s13 = inlined_call_operand.vmem [shape: f32[4,1,128], index: 13, kind: input, shape index: {}]
  %s14 = inlined_call_operand.vmem [shape: f32[1,8], index: 14, kind: output, shape index: {}]
  %s15 = sld [smem:[#allocation0]]
  $region89: #{cross_loss.1} parent=0
    _
  %s17 = ssub.s32 1, %s15
  %s18 = scalar_select 0, %s17, %s15
  %s19 = sshll.u32 %s0, 4
  %s20 = int_to_ptr.vmem [resolvable:$true] %s19
  %22 = dma.vmem_to_smem %s20, 16, [#allocation7], [#allocation6]
  %s23 = sshll.u32 %s1, 4
  %s24 = int_to_ptr.vmem [resolvable:$true] %s23
  %26 = dma.vmem_to_smem %s24, 16, [#allocation8], [#allocation6]
  %27 = dma.done [#allocation6], 32
  %28 = sfence
  $region1: #{cross_loss.1} parent=0
    #allocation9 [shape = 'u8[512]{0}', space=smem, size = 0x200, scoped, tag = 'output window, operand 0, single buffered']
    #allocation10 [shape = 's32[2]{0}', space=sflag, size = 0x8, scoped, tag = 'scoped memory for cross_loss.1']
    %29 = vsyncpa [#allocation10], 0
    loop: start=0, step=1, limit=4
    $region2: #{cross_loss.1} parent=1 // loop_pre_header
      _
    $region3: #{cross_loss.1} parent=1 // loop_header
      %s31 = sphi 0, %s35
      %p32 = scmp.ge.s32.totalorder %s31, 4
      %s38 = sphi 0, %s50
      %s39 = sphi 0, %s46
      %s40 = sphi 0, %s38
      %s41 = sphi 0, %s39
      %s42 = sphi 0, %s40
      %s43 = sphi 0, %s41
      %s55 = sphi 0, %s57
      %s58 = sphi 0, %s55
      %s59 = sphi 0, %s58
      %s75 = sphi 0, %s59
      %s83 = sphi 0, %s85
      %s86 = sphi 0, %s83
      %s87 = sphi 0, %s86
      %s103 = sphi 0, %s87
      %s111 = sphi 0, %s113
      %s114 = sphi 0, %s111
      %s115 = sphi 0, %s114
      %s131 = sphi 0, %s115
      %s139 = sphi 0, %s141
      %s142 = sphi 0, %s139
      %s143 = sphi 0, %s142
      %s159 = sphi 0, %s143
      %s169 = sphi 0, %s171
      %s172 = sphi 0, %s169
      %s173 = sphi 0, %s172
      %s189 = sphi 0, %s173
      %s199 = sphi 0, %s201
      %s202 = sphi 0, %s199
      %s203 = sphi 0, %s202
      %s219 = sphi 0, %s203
      %s229 = sphi 0, %s231
      %s232 = sphi 0, %s229
      %s233 = sphi 0, %s232
      %s249 = sphi 0, %s233
      %s259 = sphi 0, %s261
      %s262 = sphi 0, %s259
      %s263 = sphi 0, %s262
      %s279 = sphi 0, %s263
      %s283 = sphi 0, %s283
      %s285 = sphi 0, %s283
      %s286 = sphi 0, %s285
      %s300 = sphi 0, %s286
      %s304 = sphi 0, %s304
      %s306 = sphi 0, %s304
      %s307 = sphi 0, %s306
      %s321 = sphi 0, %s307
      %s325 = sphi 0, %s325
      %s327 = sphi 0, %s325
      %s328 = sphi 0, %s327
      %s342 = sphi 0, %s328
      %s346 = sphi 0, %s346
      %s348 = sphi 0, %s346
      %s349 = sphi 0, %s348
      %s363 = sphi 0, %s349
      %s367 = sphi 0, %s367
      %s369 = sphi 0, %s367
      %s370 = sphi 0, %s369
      %s384 = sphi 0, %s370
    $region4: #{cross_loss.1} parent=1 // loop_header_branch
      %34 = sbr.rel (%p32) target = $region8
    $region5: #{cross_loss.1} parent=1 // loop_body
      %s36 = ssub.s32 %s31, 1
      %s37 = ssub.s32 %s31, 2
      %s44 = sadd.s32 1, %s39
      %p45 = scmp.ge.s32.totalorder %s44, 1
      %s46 = scalar_select %p45, 0, %s44
      %s47 = sadd.s32 1, %s38
      %s48 = scalar_select %p45, %s47, %s38
      %p49 = scmp.ge.s32.totalorder %s48, 2
      %s50 = scalar_select %p49, 0, %s48
      %s51 = ssub.s32 %s38, %s50
      %s52 = ssub.s32 %s39, %s46
      %s53 = sor.u32 %s51, %s52
      %p54 = scmp.eq.s32.totalorder %s53, 0
      %s56 = sadd.s32 %s55, 1
      %s57 = scalar_select %p54, %s55, %s56
      %p60 = pneg %p54
      %p61 = scmp.eq.s32.totalorder %s31, 1
      %p62 = por %p60, %p61
      %p63 = scmp.ne.s32.totalorder %s55, %s58
      %p64 = scmp.eq.s32.totalorder %s31, 0
      %p65 = por %p63, %p64
      %p66 = scmp.ne.s32.totalorder %s55, %s58
      %p67 = scmp.eq.s32.totalorder %s36, 1
      %p68 = por %p66, %p67
      %p69 = scmp.ne.s32.totalorder %s58, %s59
      %p70 = scmp.eq.s32.totalorder %s36, 0
      %p71 = por %p69, %p70
      %p72 = scmp.ne.s32.totalorder %s58, %s59
      %p73 = scmp.eq.s32.totalorder %s37, 1
      %p74 = por %p72, %p73
      %p76 = scmp.ne.s32.totalorder %s59, %s75
      %p77 = scmp.eq.s32.totalorder %s37, 0
      %p78 = por %p76, %p77
      %s79 = ssub.s32 %s38, %s50
      %s80 = ssub.s32 %s39, %s46
      %s81 = sor.u32 %s79, %s80
      %p82 = scmp.eq.s32.totalorder %s81, 0
      %s84 = sadd.s32 %s83, 1
      %s85 = scalar_select %p82, %s83, %s84
      %p88 = pneg %p82
      %p89 = scmp.eq.s32.totalorder %s31, 1
      %p90 = por %p88, %p89
      %p91 = scmp.ne.s32.totalorder %s83, %s86
      %p92 = scmp.eq.s32.totalorder %s31, 0
      %p93 = por %p91, %p92
      %p94 = scmp.ne.s32.totalorder %s83, %s86
      %p95 = scmp.eq.s32.totalorder %s36, 1
      %p96 = por %p94, %p95
      %p97 = scmp.ne.s32.totalorder %s86, %s87
      %p98 = scmp.eq.s32.totalorder %s36, 0
      %p99 = por %p97, %p98
      %p100 = scmp.ne.s32.totalorder %s86, %s87
      %p101 = scmp.eq.s32.totalorder %s37, 1
      %p102 = por %p100, %p101
      %p104 = scmp.ne.s32.totalorder %s87, %s103
      %p105 = scmp.eq.s32.totalorder %s37, 0
      %p106 = por %p104, %p105
      %s107 = ssub.s32 %s38, %s50
      %s108 = ssub.s32 %s39, %s46
      %s109 = sor.u32 %s107, %s108
      %p110 = scmp.eq.s32.totalorder %s109, 0
      %s112 = sadd.s32 %s111, 1
      %s113 = scalar_select %p110, %s111, %s112
      %p116 = pneg %p110
      %p117 = scmp.eq.s32.totalorder %s31, 1
      %p118 = por %p116, %p117
      %p119 = scmp.ne.s32.totalorder %s111, %s114
      %p120 = scmp.eq.s32.totalorder %s31, 0
      %p121 = por %p119, %p120
      %p122 = scmp.ne.s32.totalorder %s111, %s114
      %p123 = scmp.eq.s32.totalorder %s36, 1
      %p124 = por %p122, %p123
      %p125 = scmp.ne.s32.totalorder %s114, %s115
      %p126 = scmp.eq.s32.totalorder %s36, 0
      %p127 = por %p125, %p126
      %p128 = scmp.ne.s32.totalorder %s114, %s115
      %p129 = scmp.eq.s32.totalorder %s37, 1
      %p130 = por %p128, %p129
      %p132 = scmp.ne.s32.totalorder %s115, %s131
      %p133 = scmp.eq.s32.totalorder %s37, 0
      %p134 = por %p132, %p133
      %s135 = ssub.s32 %s38, %s50
      %s136 = ssub.s32 %s39, %s46
      %s137 = sor.u32 %s135, %s136
      %p138 = scmp.eq.s32.totalorder %s137, 0
      %s140 = sadd.s32 %s139, 1
      %s141 = scalar_select %p138, %s139, %s140
      %p144 = pneg %p138
      %p145 = scmp.eq.s32.totalorder %s31, 1
      %p146 = por %p144, %p145
      %p147 = scmp.ne.s32.totalorder %s139, %s142
      %p148 = scmp.eq.s32.totalorder %s31, 0
      %p149 = por %p147, %p148
      %p150 = scmp.ne.s32.totalorder %s139, %s142
      %p151 = scmp.eq.s32.totalorder %s36, 1
      %p152 = por %p150, %p151
      %p153 = scmp.ne.s32.totalorder %s142, %s143
      %p154 = scmp.eq.s32.totalorder %s36, 0
      %p155 = por %p153, %p154
      %p156 = scmp.ne.s32.totalorder %s142, %s143
      %p157 = scmp.eq.s32.totalorder %s37, 1
      %p158 = por %p156, %p157
      %p160 = scmp.ne.s32.totalorder %s143, %s159
      %p161 = scmp.eq.s32.totalorder %s37, 0
      %p162 = por %p160, %p161
      %s163 = sld [smem:[#allocation7 + %s38]]
      %s164 = sld [smem:[#allocation7 + %s50]]
      %s165 = ssub.s32 %s163, %s164
      %s166 = ssub.s32 %s39, %s46
      %s167 = sor.u32 %s165, %s166
      %p168 = scmp.eq.s32.totalorder %s167, 0
      %s170 = sadd.s32 %s169, 1
      %s171 = scalar_select %p168, %s169, %s170
      %p174 = pneg %p168
      %p175 = scmp.eq.s32.totalorder %s31, 1
      %p176 = por %p174, %p175
      %p177 = scmp.ne.s32.totalorder %s169, %s172
      %p178 = scmp.eq.s32.totalorder %s31, 0
      %p179 = por %p177, %p178
      %p180 = scmp.ne.s32.totalorder %s169, %s172
      %p181 = scmp.eq.s32.totalorder %s36, 1
      %p182 = por %p180, %p181
      %p183 = scmp.ne.s32.totalorder %s172, %s173
      %p184 = scmp.eq.s32.totalorder %s36, 0
      %p185 = por %p183, %p184
      %p186 = scmp.ne.s32.totalorder %s172, %s173
      %p187 = scmp.eq.s32.totalorder %s37, 1
      %p188 = por %p186, %p187
      %p190 = scmp.ne.s32.totalorder %s173, %s189
      %p191 = scmp.eq.s32.totalorder %s37, 0
      %p192 = por %p190, %p191
      %s193 = sld [smem:[#allocation8 + %s38]]
      %s194 = sld [smem:[#allocation8 + %s50]]
      %s195 = ssub.s32 %s193, %s194
      %s196 = ssub.s32 %s39, %s46
      %s197 = sor.u32 %s195, %s196
      %p198 = scmp.eq.s32.totalorder %s197, 0
      %s200 = sadd.s32 %s199, 1
      %s201 = scalar_select %p198, %s199, %s200
      %p204 = pneg %p198
      %p205 = scmp.eq.s32.totalorder %s31, 1
      %p206 = por %p204, %p205
      %p207 = scmp.ne.s32.totalorder %s199, %s202
      %p208 = scmp.eq.s32.totalorder %s31, 0
      %p209 = por %p207, %p208
      %p210 = scmp.ne.s32.totalorder %s199, %s202
      %p211 = scmp.eq.s32.totalorder %s36, 1
      %p212 = por %p210, %p211
      %p213 = scmp.ne.s32.totalorder %s202, %s203
      %p214 = scmp.eq.s32.totalorder %s36, 0
      %p215 = por %p213, %p214
      %p216 = scmp.ne.s32.totalorder %s202, %s203
      %p217 = scmp.eq.s32.totalorder %s37, 1
      %p218 = por %p216, %p217
      %p220 = scmp.ne.s32.totalorder %s203, %s219
      %p221 = scmp.eq.s32.totalorder %s37, 0
      %p222 = por %p220, %p221
      %s223 = sld [smem:[#allocation7 + %s38]]
      %s224 = sld [smem:[#allocation7 + %s50]]
      %s225 = ssub.s32 %s223, %s224
      %s226 = ssub.s32 %s39, %s46
      %s227 = sor.u32 %s225, %s226
      %p228 = scmp.eq.s32.totalorder %s227, 0
      %s230 = sadd.s32 %s229, 1
      %s231 = scalar_select %p228, %s229, %s230
      %p234 = pneg %p228
      %p235 = scmp.eq.s32.totalorder %s31, 1
      %p236 = por %p234, %p235
      %p237 = scmp.ne.s32.totalorder %s229, %s232
      %p238 = scmp.eq.s32.totalorder %s31, 0
      %p239 = por %p237, %p238
      %p240 = scmp.ne.s32.totalorder %s229, %s232
      %p241 = scmp.eq.s32.totalorder %s36, 1
      %p242 = por %p240, %p241
      %p243 = scmp.ne.s32.totalorder %s232, %s233
      %p244 = scmp.eq.s32.totalorder %s36, 0
      %p245 = por %p243, %p244
      %p246 = scmp.ne.s32.totalorder %s232, %s233
      %p247 = scmp.eq.s32.totalorder %s37, 1
      %p248 = por %p246, %p247
      %p250 = scmp.ne.s32.totalorder %s233, %s249
      %p251 = scmp.eq.s32.totalorder %s37, 0
      %p252 = por %p250, %p251
      %s253 = sld [smem:[#allocation8 + %s38]]
      %s254 = sld [smem:[#allocation8 + %s50]]
      %s255 = ssub.s32 %s253, %s254
      %s256 = ssub.s32 %s39, %s46
      %s257 = sor.u32 %s255, %s256
      %p258 = scmp.eq.s32.totalorder %s257, 0
      %s260 = sadd.s32 %s259, 1
      %s261 = scalar_select %p258, %s259, %s260
      %p264 = pneg %p258
      %p265 = scmp.eq.s32.totalorder %s31, 1
      %p266 = por %p264, %p265
      %p267 = scmp.ne.s32.totalorder %s259, %s262
      %p268 = scmp.eq.s32.totalorder %s31, 0
      %p269 = por %p267, %p268
      %p270 = scmp.ne.s32.totalorder %s259, %s262
      %p271 = scmp.eq.s32.totalorder %s36, 1
      %p272 = por %p270, %p271
      %p273 = scmp.ne.s32.totalorder %s262, %s263
      %p274 = scmp.eq.s32.totalorder %s36, 0
      %p275 = por %p273, %p274
      %p276 = scmp.ne.s32.totalorder %s262, %s263
      %p277 = scmp.eq.s32.totalorder %s37, 1
      %p278 = por %p276, %p277
      %p280 = scmp.ne.s32.totalorder %s263, %s279
      %p281 = scmp.eq.s32.totalorder %s37, 0
      %p282 = por %p280, %p281
      %s284 = sadd.s32 %s283, 1
      %p287 = scmp.eq.s32.totalorder %s31, 1
      %p288 = scmp.ne.s32.totalorder %s283, %s285
      %p289 = scmp.eq.s32.totalorder %s31, 0
      %p290 = por %p288, %p289
      %p291 = scmp.ne.s32.totalorder %s283, %s285
      %p292 = scmp.eq.s32.totalorder %s36, 1
      %p293 = por %p291, %p292
      %p294 = scmp.ne.s32.totalorder %s285, %s286
      %p295 = scmp.eq.s32.totalorder %s36, 0
      %p296 = por %p294, %p295
      %p297 = scmp.ne.s32.totalorder %s285, %s286
      %p298 = scmp.eq.s32.totalorder %s37, 1
      %p299 = por %p297, %p298
      %p301 = scmp.ne.s32.totalorder %s286, %s300
      %p302 = scmp.eq.s32.totalorder %s37, 0
      %p303 = por %p301, %p302
      %s305 = sadd.s32 %s304, 1
      %p308 = scmp.eq.s32.totalorder %s31, 1
      %p309 = scmp.ne.s32.totalorder %s304, %s306
      %p310 = scmp.eq.s32.totalorder %s31, 0
      %p311 = por %p309, %p310
      %p312 = scmp.ne.s32.totalorder %s304, %s306
      %p313 = scmp.eq.s32.totalorder %s36, 1
      %p314 = por %p312, %p313
      %p315 = scmp.ne.s32.totalorder %s306, %s307
      %p316 = scmp.eq.s32.totalorder %s36, 0
      %p317 = por %p315, %p316
      %p318 = scmp.ne.s32.totalorder %s306, %s307
      %p319 = scmp.eq.s32.totalorder %s37, 1
      %p320 = por %p318, %p319
      %p322 = scmp.ne.s32.totalorder %s307, %s321
      %p323 = scmp.eq.s32.totalorder %s37, 0
      %p324 = por %p322, %p323
      %s326 = sadd.s32 %s325, 1
      %p329 = scmp.eq.s32.totalorder %s31, 1
      %p330 = scmp.ne.s32.totalorder %s325, %s327
      %p331 = scmp.eq.s32.totalorder %s31, 0
      %p332 = por %p330, %p331
      %p333 = scmp.ne.s32.totalorder %s325, %s327
      %p334 = scmp.eq.s32.totalorder %s36, 1
      %p335 = por %p333, %p334
      %p336 = scmp.ne.s32.totalorder %s327, %s328
      %p337 = scmp.eq.s32.totalorder %s36, 0
      %p338 = por %p336, %p337
      %p339 = scmp.ne.s32.totalorder %s327, %s328
      %p340 = scmp.eq.s32.totalorder %s37, 1
      %p341 = por %p339, %p340
      %p343 = scmp.ne.s32.totalorder %s328, %s342
      %p344 = scmp.eq.s32.totalorder %s37, 0
      %p345 = por %p343, %p344
      %s347 = sadd.s32 %s346, 1
      %p350 = scmp.eq.s32.totalorder %s31, 1
      %p351 = scmp.ne.s32.totalorder %s346, %s348
      %p352 = scmp.eq.s32.totalorder %s31, 0
      %p353 = por %p351, %p352
      %p354 = scmp.ne.s32.totalorder %s346, %s348
      %p355 = scmp.eq.s32.totalorder %s36, 1
      %p356 = por %p354, %p355
      %p357 = scmp.ne.s32.totalorder %s348, %s349
      %p358 = scmp.eq.s32.totalorder %s36, 0
      %p359 = por %p357, %p358
      %p360 = scmp.ne.s32.totalorder %s348, %s349
      %p361 = scmp.eq.s32.totalorder %s37, 1
      %p362 = por %p360, %p361
      %p364 = scmp.ne.s32.totalorder %s349, %s363
      %p365 = scmp.eq.s32.totalorder %s37, 0
      %p366 = por %p364, %p365
      %s368 = sadd.s32 %s367, 1
      %p371 = scmp.eq.s32.totalorder %s31, 1
      %p372 = scmp.ne.s32.totalorder %s367, %s369
      %p373 = scmp.eq.s32.totalorder %s31, 0
      %p374 = por %p372, %p373
      %p375 = scmp.ne.s32.totalorder %s367, %s369
      %p376 = scmp.eq.s32.totalorder %s36, 1
      %p377 = por %p375, %p376
      %p378 = scmp.ne.s32.totalorder %s369, %s370
      %p379 = scmp.eq.s32.totalorder %s36, 0
      %p380 = por %p378, %p379
      %p381 = scmp.ne.s32.totalorder %s369, %s370
      %p382 = scmp.eq.s32.totalorder %s37, 1
      %p383 = por %p381, %p382
      %p385 = scmp.ne.s32.totalorder %s370, %s384
      %p386 = scmp.eq.s32.totalorder %s37, 0
      %p387 = por %p385, %p386
      %p388 = scmp.le.s32.totalorder 1, %s31
      %p389 = scmp.lt.s32.totalorder %s31, 3
      %p390 = pnand %p388, %p389
      %p391 = pneg %p390
      // Predicated region
      $region9: #{cross_loss.1} parent=5 // pred_check
        _
      $region10: #{cross_loss.1} parent=5 // pred_check_branch
        %393 = sbr.rel (%p390) target = $region12
      $region11: #{cross_loss.1} parent=5 // pred_region
        %s394 = ssub.s32 %s31, 1
        // Predicated region
        $region13: #{cross_loss.1} parent=11 // pred_check
          %p395 = pneg %p296
        $region14: #{cross_loss.1} parent=11 // pred_check_branch
          %397 = sbr.rel (%p395) target = $region16
        $region15: #{cross_loss.1} parent=11 // pred_region
          _
        $region16: #{cross_loss.1} parent=11 // pred_fallthru
          _
        // Predicated region
        $region17: #{cross_loss.1} parent=11 // pred_check
          %p398 = pneg %p317
        $region18: #{cross_loss.1} parent=11 // pred_check_branch
          %400 = sbr.rel (%p398) target = $region20
        $region19: #{cross_loss.1} parent=11 // pred_region
          _
        $region20: #{cross_loss.1} parent=11 // pred_fallthru
          _
        // Predicated region
        $region21: #{cross_loss.1} parent=11 // pred_check
          %p401 = pneg %p338
        $region22: #{cross_loss.1} parent=11 // pred_check_branch
          %403 = sbr.rel (%p401) target = $region24
        $region23: #{cross_loss.1} parent=11 // pred_region
          _
        $region24: #{cross_loss.1} parent=11 // pred_fallthru
          _
        // Predicated region
        $region25: #{cross_loss.1} parent=11 // pred_check
          %p404 = pneg %p359
        $region26: #{cross_loss.1} parent=11 // pred_check_branch
          %406 = sbr.rel (%p404) target = $region28
        $region27: #{cross_loss.1} parent=11 // pred_region
          _
        $region28: #{cross_loss.1} parent=11 // pred_fallthru
          _
      $region12: #{cross_loss.1} parent=5 // pred_fallthru
        _
      %p407 = scmp.lt.s32.totalorder %s31, 2
      // Predicated region
      $region29: #{cross_loss.1} parent=5 // pred_check
        %p408 = pneg %p407
      $region30: #{cross_loss.1} parent=5 // pred_check_branch
        %410 = sbr.rel (%p408) target = $region32
      $region31: #{cross_loss.1} parent=5 // pred_region
        // Predicated region
        $region33: #{cross_loss.1} parent=31 // pred_check
          %p411 = pneg %p65
        $region34: #{cross_loss.1} parent=31 // pred_check_branch
          %413 = sbr.rel (%p411) target = $region36
        $region35: #{cross_loss.1} parent=31 // pred_region
          %p414 = scmp.lt.s32.totalorder %s38, 1
          %s415 = scalar_select %p414, %s38, 1
          %p416 = scmp.lt.s32.totalorder %s39, 0
          %s417 = scalar_select %p416, %s39, 0
          %s418 = sadd.s32 %s417, %s415
          %s419 = smul.addr %s418, 8
          %s420 = scalar_lea.vmem %s2, %s419
        $region36: #{cross_loss.1} parent=31 // pred_fallthru
          _
        // Predicated region
        $region37: #{cross_loss.1} parent=31 // pred_check
          %p421 = pneg %p93
        $region38: #{cross_loss.1} parent=31 // pred_check_branch
          %423 = sbr.rel (%p421) target = $region40
        $region39: #{cross_loss.1} parent=31 // pred_region
          %p424 = scmp.lt.s32.totalorder %s38, 1
          %s425 = scalar_select %p424, %s38, 1
          %p426 = scmp.lt.s32.totalorder %s39, 0
          %s427 = scalar_select %p426, %s39, 0
          %s428 = sadd.s32 %s427, %s425
          %s429 = smul.addr %s428, 8
          %s430 = scalar_lea.vmem %s3, %s429
        $region40: #{cross_loss.1} parent=31 // pred_fallthru
          _
        // Predicated region
        $region41: #{cross_loss.1} parent=31 // pred_check
          %p431 = pneg %p121
        $region42: #{cross_loss.1} parent=31 // pred_check_branch
          %433 = sbr.rel (%p431) target = $region44
        $region43: #{cross_loss.1} parent=31 // pred_region
          %p434 = scmp.lt.s32.totalorder %s38, 1
          %s435 = scalar_select %p434, %s38, 1
          %p436 = scmp.lt.s32.totalorder %s39, 0
          %s437 = scalar_select %p436, %s39, 0
          %s438 = sadd.s32 %s437, %s435
          %s439 = smul.addr %s438, 8
          %s440 = scalar_lea.vmem %s4, %s439
        $region44: #{cross_loss.1} parent=31 // pred_fallthru
          _
        // Predicated region
        $region45: #{cross_loss.1} parent=31 // pred_check
          %p441 = pneg %p149
        $region46: #{cross_loss.1} parent=31 // pred_check_branch
          %443 = sbr.rel (%p441) target = $region48
        $region47: #{cross_loss.1} parent=31 // pred_region
          %p444 = scmp.lt.s32.totalorder %s38, 1
          %s445 = scalar_select %p444, %s38, 1
          %p446 = scmp.lt.s32.totalorder %s39, 0
          %s447 = scalar_select %p446, %s39, 0
          %s448 = sadd.s32 %s447, %s445
          %s449 = smul.addr %s448, 8
          %s450 = scalar_lea.vmem %s5, %s449
        $region48: #{cross_loss.1} parent=31 // pred_fallthru
          _
        // Predicated region
        $region49: #{cross_loss.1} parent=31 // pred_check
          %p451 = pneg %p179
        $region50: #{cross_loss.1} parent=31 // pred_check_branch
          %453 = sbr.rel (%p451) target = $region52
        $region51: #{cross_loss.1} parent=31 // pred_region
          %s454 = sld [smem:[#allocation7 + %s38]]
          %p455 = scmp.lt.s32.totalorder %s454, 3
          %s456 = scalar_select %p455, %s454, 3
          %p457 = scmp.lt.s32.totalorder %s39, 0
          %s458 = scalar_select %p457, %s39, 0
          %s459 = sadd.s32 %s458, %s456
          %s460 = smul.addr %s459, 8
          %s461 = scalar_lea.vmem %s6, %s460
          %s462 = sld [smem:[#allocation7 + %s38]]
        $region52: #{cross_loss.1} parent=31 // pred_fallthru
          _
        // Predicated region
        $region53: #{cross_loss.1} parent=31 // pred_check
          %p463 = pneg %p209
        $region54: #{cross_loss.1} parent=31 // pred_check_branch
          %465 = sbr.rel (%p463) target = $region56
        $region55: #{cross_loss.1} parent=31 // pred_region
          %s466 = sld [smem:[#allocation8 + %s38]]
          %p467 = scmp.lt.s32.totalorder %s466, 3
          %s468 = scalar_select %p467, %s466, 3
          %p469 = scmp.lt.s32.totalorder %s39, 0
          %s470 = scalar_select %p469, %s39, 0
          %s471 = sadd.s32 %s470, %s468
          %s472 = smul.addr %s471, 8
          %s473 = scalar_lea.vmem %s7, %s472
          %s474 = sld [smem:[#allocation8 + %s38]]
        $region56: #{cross_loss.1} parent=31 // pred_fallthru
          _
        // Predicated region
        $region57: #{cross_loss.1} parent=31 // pred_check
          %p475 = pneg %p239
        $region58: #{cross_loss.1} parent=31 // pred_check_branch
          %477 = sbr.rel (%p475) target = $region60
        $region59: #{cross_loss.1} parent=31 // pred_region
          %s478 = sld [smem:[#allocation7 + %s38]]
          %p479 = scmp.lt.s32.totalorder %s478, 3
          %s480 = scalar_select %p479, %s478, 3
          %p481 = scmp.lt.s32.totalorder %s39, 0
          %s482 = scalar_select %p481, %s39, 0
          %s483 = sadd.s32 %s482, %s480
          %s484 = smul.addr %s483, 8
          %s485 = scalar_lea.vmem %s8, %s484
          %s486 = sld [smem:[#allocation7 + %s38]]
        $region60: #{cross_loss.1} parent=31 // pred_fallthru
          _
        // Predicated region
        $region61: #{cross_loss.1} parent=31 // pred_check
          %p487 = pneg %p269
        $region62: #{cross_loss.1} parent=31 // pred_check_branch
          %489 = sbr.rel (%p487) target = $region64
        $region63: #{cross_loss.1} parent=31 // pred_region
          %s490 = sld [smem:[#allocation8 + %s38]]
          %p491 = scmp.lt.s32.totalorder %s490, 3
          %s492 = scalar_select %p491, %s490, 3
          %p493 = scmp.lt.s32.totalorder %s39, 0
          %s494 = scalar_select %p493, %s39, 0
          %s495 = sadd.s32 %s494, %s492
          %s496 = smul.addr %s495, 8
          %s497 = scalar_lea.vmem %s9, %s496
          %s498 = sld [smem:[#allocation8 + %s38]]
        $region64: #{cross_loss.1} parent=31 // pred_fallthru
          _
      $region32: #{cross_loss.1} parent=5 // pred_fallthru
        _
      %p499 = scmp.le.s32.totalorder 1, %s31
      %p500 = scmp.lt.s32.totalorder %s31, 3
      %p501 = pnand %p499, %p500
      %p502 = pneg %p501
      // Predicated region
      $region65: #{cross_loss.1} parent=5 // pred_check
        _
      $region66: #{cross_loss.1} parent=5 // pred_check_branch
        %504 = sbr.rel (%p501) target = $region68
      $region67: #{cross_loss.1} parent=5 // pred_region
        %s505 = ssub.s32 %s31, 1
        %p506 = scmp.lt.s32.totalorder %s40, 1
        %s507 = scalar_select %p506, %s40, 1
        %p508 = scmp.lt.s32.totalorder %s41, 0
        %s509 = scalar_select %p508, %s41, 0
        %s510 = sadd.s32 %s509, %s507
        %s511 = smul.addr %s510, 8
        %s512 = scalar_lea.vmem %s2, %s511
        %p513 = pneg %p71
        %p514 = pneg %p68
        %p515 = scmp.lt.s32.totalorder %s40, 1
        %s516 = scalar_select %p515, %s40, 1
        %p517 = scmp.lt.s32.totalorder %s41, 0
        %s518 = scalar_select %p517, %s41, 0
        %s519 = sadd.s32 %s518, %s516
        %s520 = smul.addr %s519, 8
        %s521 = scalar_lea.vmem %s3, %s520
        %p522 = pneg %p99
        %p523 = pneg %p96
        %p524 = scmp.lt.s32.totalorder %s40, 1
        %s525 = scalar_select %p524, %s40, 1
        %p526 = scmp.lt.s32.totalorder %s41, 0
        %s527 = scalar_select %p526, %s41, 0
        %s528 = sadd.s32 %s527, %s525
        %s529 = smul.addr %s528, 8
        %s530 = scalar_lea.vmem %s4, %s529
        %p531 = pneg %p127
        %p532 = pneg %p124
        %p533 = scmp.lt.s32.totalorder %s40, 1
        %s534 = scalar_select %p533, %s40, 1
        %p535 = scmp.lt.s32.totalorder %s41, 0
        %s536 = scalar_select %p535, %s41, 0
        %s537 = sadd.s32 %s536, %s534
        %s538 = smul.addr %s537, 8
        %s539 = scalar_lea.vmem %s5, %s538
        %p540 = pneg %p155
        %p541 = pneg %p152
        %s542 = sld [smem:[#allocation7 + %s40]]
        %p543 = scmp.lt.s32.totalorder %s542, 3
        %s544 = scalar_select %p543, %s542, 3
        %p545 = scmp.lt.s32.totalorder %s41, 0
        %s546 = scalar_select %p545, %s41, 0
        %s547 = sadd.s32 %s546, %s544
        %s548 = smul.addr %s547, 8
        %s549 = scalar_lea.vmem %s6, %s548
        %p550 = pneg %p185
        %p551 = pneg %p182
        %s552 = sld [smem:[#allocation8 + %s40]]
        %p553 = scmp.lt.s32.totalorder %s552, 3
        %s554 = scalar_select %p553, %s552, 3
        %p555 = scmp.lt.s32.totalorder %s41, 0
        %s556 = scalar_select %p555, %s41, 0
        %s557 = sadd.s32 %s556, %s554
        %s558 = smul.addr %s557, 8
        %s559 = scalar_lea.vmem %s7, %s558
        %p560 = pneg %p215
        %p561 = pneg %p212
        %s562 = sld [smem:[#allocation7 + %s40]]
        %p563 = scmp.lt.s32.totalorder %s562, 3
        %s564 = scalar_select %p563, %s562, 3
        %p565 = scmp.lt.s32.totalorder %s41, 0
        %s566 = scalar_select %p565, %s41, 0
        %s567 = sadd.s32 %s566, %s564
        %s568 = smul.addr %s567, 8
        %s569 = scalar_lea.vmem %s8, %s568
        %p570 = pneg %p245
        %p571 = pneg %p242
        %s572 = sld [smem:[#allocation8 + %s40]]
        %p573 = scmp.lt.s32.totalorder %s572, 3
        %s574 = scalar_select %p573, %s572, 3
        %p575 = scmp.lt.s32.totalorder %s41, 0
        %s576 = scalar_select %p575, %s41, 0
        %s577 = sadd.s32 %s576, %s574
        %s578 = smul.addr %s577, 8
        %s579 = scalar_lea.vmem %s9, %s578
        %p580 = pneg %p275
        %p581 = pneg %p272
        %p582 = pneg %p296
        %p583 = pneg %p293
        %p584 = pneg %p317
        %p585 = pneg %p314
        %p586 = pneg %p338
        %p587 = pneg %p335
        %p588 = pneg %p359
        %p589 = pneg %p356
        %p590 = pneg %p380
        %p591 = pneg %p377
        %p592 = scmp.lt.s32.totalorder %s40, 1
        %s593 = scalar_select %p592, %s40, 1
        %p594 = scmp.lt.s32.totalorder %s41, 0
        %s595 = scalar_select %p594, %s41, 0
        %s596 = sadd.s32 %s595, %s593
        %s597 = smul.addr %s596, 8
        %s598 = scalar_lea.vmem %s2, %s597
        %p599 = scmp.lt.s32.totalorder %s40, 1
        %s600 = scalar_select %p599, %s40, 1
        %p601 = scmp.lt.s32.totalorder %s41, 0
        %s602 = scalar_select %p601, %s41, 0
        %s603 = sadd.s32 %s602, %s600
        %s604 = smul.addr %s603, 8
        %s605 = scalar_lea.vmem %s3, %s604
        %p606 = scmp.lt.s32.totalorder %s40, 1
        %s607 = scalar_select %p606, %s40, 1
        %p608 = scmp.lt.s32.totalorder %s41, 0
        %s609 = scalar_select %p608, %s41, 0
        %s610 = sadd.s32 %s609, %s607
        %s611 = smul.addr %s610, 8
        %s612 = scalar_lea.vmem %s4, %s611
        %p613 = scmp.lt.s32.totalorder %s40, 1
        %s614 = scalar_select %p613, %s40, 1
        %p615 = scmp.lt.s32.totalorder %s41, 0
        %s616 = scalar_select %p615, %s41, 0
        %s617 = sadd.s32 %s616, %s614
        %s618 = smul.addr %s617, 8
        %s619 = scalar_lea.vmem %s5, %s618
        %s620 = sld [smem:[#allocation7 + %s40]]
        %p621 = scmp.lt.s32.totalorder %s620, 3
        %s622 = scalar_select %p621, %s620, 3
        %p623 = scmp.lt.s32.totalorder %s41, 0
        %s624 = scalar_select %p623, %s41, 0
        %s625 = sadd.s32 %s624, %s622
        %s626 = smul.addr %s625, 8
        %s627 = scalar_lea.vmem %s6, %s626
        %s628 = sld [smem:[#allocation7 + %s40]]
        %s629 = sld [smem:[#allocation8 + %s40]]
        %p630 = scmp.lt.s32.totalorder %s629, 3
        %s631 = scalar_select %p630, %s629, 3
        %p632 = scmp.lt.s32.totalorder %s41, 0
        %s633 = scalar_select %p632, %s41, 0
        %s634 = sadd.s32 %s633, %s631
        %s635 = smul.addr %s634, 8
        %s636 = scalar_lea.vmem %s7, %s635
        %s637 = sld [smem:[#allocation8 + %s40]]
        %s638 = sld [smem:[#allocation7 + %s40]]
        %p639 = scmp.lt.s32.totalorder %s638, 3
        %s640 = scalar_select %p639, %s638, 3
        %p641 = scmp.lt.s32.totalorder %s41, 0
        %s642 = scalar_select %p641, %s41, 0
        %s643 = sadd.s32 %s642, %s640
        %s644 = smul.addr %s643, 8
        %s645 = scalar_lea.vmem %s8, %s644
        %s646 = sld [smem:[#allocation7 + %s40]]
        %s647 = sld [smem:[#allocation8 + %s40]]
        %p648 = scmp.lt.s32.totalorder %s647, 3
        %s649 = scalar_select %p648, %s647, 3
        %p650 = scmp.lt.s32.totalorder %s41, 0
        %s651 = scalar_select %p650, %s41, 0
        %s652 = sadd.s32 %s651, %s649
        %s653 = smul.addr %s652, 8
        %s654 = scalar_lea.vmem %s9, %s653
        %s655 = sld [smem:[#allocation8 + %s40]]
        %p656 = scmp.eq.s32.totalorder %s40, 0
        %p657 = scmp.eq.s32.totalorder %s41, 0
        %p658 = pnand %p656, %p657
        %p659 = pneg %p658
        %p660 = scmp.eq.s32.totalorder %s40, 1
        %p661 = pnand %p660, %p657
        %p662 = pneg %p661
        // Predicated region
        $region69: #{cross_loss.1} parent=67 // pred_check
          _
        $region70: #{cross_loss.1} parent=67 // pred_check_branch
          %664 = sbr.rel (%p658) target = $region72
        $region71: #{cross_loss.1} parent=67 // pred_region
          %665 = vst [vmem:[#allocation2] sm:$0xff] 0.0
          %666 = vst [vmem:[#allocation3] sm:$0xff] 0.0
          %667 = vst [vmem:[#allocation4] sm:$0xff] 0.0
          %668 = vst [vmem:[#allocation5] sm:$0xff] 0.0
        $region72: #{cross_loss.1} parent=67 // pred_fallthru
          _
        %v669 = vld [vmem:[#allocation2] sm:$0xff]
        %v670 = vld [vmem:[%s598] sm:$0xff]
        %v671 = vld [vmem:[%s627] sm:$0xff]
        %v672 = vsub.f32 %v670, %v671
        %v673 = vand.u32 2147483647, %v672
        %v674 = vadd.f32 %v669, %v673
        %675 = vst [vmem:[#allocation2] sm:$0xff] %v674
        %v676 = vld [vmem:[#allocation3] sm:$0xff]
        %v677 = vld [vmem:[%s605] sm:$0xff]
        %v678 = vld [vmem:[%s636] sm:$0xff]
        %v679 = vsub.f32 %v677, %v678
        %v680 = vand.u32 2147483647, %v679
        %v681 = vadd.f32 %v676, %v680
        %682 = vst [vmem:[#allocation3] sm:$0xff] %v681
        %v683 = vld [vmem:[#allocation4] sm:$0xff]
        %v684 = vld [vmem:[%s612] sm:$0xff]
        %v685 = vld [vmem:[%s645] sm:$0xff]
        %v686 = vsub.f32 %v684, %v685
        %v687 = vand.u32 2147483647, %v686
        %v688 = vadd.f32 %v683, %v687
        %689 = vst [vmem:[#allocation4] sm:$0xff] %v688
        %v690 = vld [vmem:[#allocation5] sm:$0xff]
        %v691 = vld [vmem:[%s619] sm:$0xff]
        %v692 = vld [vmem:[%s654] sm:$0xff]
        %v693 = vsub.f32 %v691, %v692
        %v694 = vand.u32 2147483647, %v693
        %v695 = vadd.f32 %v690, %v694
        %696 = vst [vmem:[#allocation5] sm:$0xff] %v695
        // Predicated region
        $region73: #{cross_loss.1} parent=67 // pred_check
          _
        $region74: #{cross_loss.1} parent=67 // pred_check_branch
          %698 = sbr.rel (%p661) target = $region76
        $region75: #{cross_loss.1} parent=67 // pred_region
          %s699 = sld [smem:[#allocation7]]
          %s700 = sld [smem:[#allocation8]]
          %v701 = vld [vmem:[%s10] sm:$0x1]
          %v702 = vld [vmem:[%s11] sm:$0x1]
          %s703 = scalar_lea.vmem %s12, %s699
          %v704 = vld [vmem:[%s703] sm:$0x1]
          %v705 = vsub.f32 %v701, %v704
          %v706 = vand.u32 2147483647, %v705
          %v707 = vadd.f32 %v706, 0.0
          %s708 = scalar_lea.vmem %s12, %s700
          %v709 = vld [vmem:[%s708] sm:$0x1]
          %v710 = vsub.f32 %v702, %v709
          %v711 = vand.u32 2147483647, %v710
          %v712 = vadd.f32 %v711, 0.0
          %s713 = scalar_lea.vmem %s13, %s699
          %v714 = vld [vmem:[%s713] sm:$0x1]
          %v715 = vsub.f32 %v701, %v714
          %v716 = vand.u32 2147483647, %v715
          %v717 = vadd.f32 %v716, 0.0
          %s718 = scalar_lea.vmem %s13, %s700
          %v719 = vld [vmem:[%s718] sm:$0x1]
          %v720 = vsub.f32 %v702, %v719
          %v721 = vand.u32 2147483647, %v720
          %v722 = vadd.f32 %v721, 0.0
          %s723 = sld [smem:[#allocation7 + $0x1]]
          %s724 = sld [smem:[#allocation8 + $0x1]]
          %s725 = scalar_lea.vmem %s10, 1
          %v726 = vld [vmem:[%s725] sm:$0x1]
          %s727 = scalar_lea.vmem %s11, 1
          %v728 = vld [vmem:[%s727] sm:$0x1]
          %s729 = scalar_lea.vmem %s12, %s723
          %v730 = vld [vmem:[%s729] sm:$0x1]
          %v731 = vsub.f32 %v726, %v730
          %v732 = vand.u32 2147483647, %v731
          %v733 = vadd.f32 %v707, %v732
          %s734 = scalar_lea.vmem %s12, %s724
          %v735 = vld [vmem:[%s734] sm:$0x1]
          %v736 = vsub.f32 %v728, %v735
          %v737 = vand.u32 2147483647, %v736
          %v738 = vadd.f32 %v712, %v737
          %s739 = scalar_lea.vmem %s13, %s723
          %v740 = vld [vmem:[%s739] sm:$0x1]
          %v741 = vsub.f32 %v726, %v740
          %v742 = vand.u32 2147483647, %v741
          %v743 = vadd.f32 %v717, %v742
          %s744 = scalar_lea.vmem %s13, %s724
          %v745 = vld [vmem:[%s744] sm:$0x1]
          %v746 = vsub.f32 %v728, %v745
          %v747 = vand.u32 2147483647, %v746
          %v748 = vadd.f32 %v722, %v747
          %vm749 = vcmask 1040384
          %v750 = vsel %vm749, %v733, 0.0
          %751 = vadd.xlane.f32.xlu0 %v750
          %v752 = vpop.xlane.xlu0 %751
          %v753 = vrot.slane %v752, 4
          %v754 = vadd.f32 %v752, %v753
          %v755 = vrot.slane %v754, 2
          %v756 = vadd.f32 %v754, %v755
          %v757 = vrot.slane %v756, 1
          %v758 = vadd.f32 %v756, %v757
          %s759 = vtos %v758
          %s760 = scalar_lea.smem [#allocation9], 0
          %761 = sst [smem:[%s760]] %s759
          %v762 = vsel %vm749, %v738, 0.0
          %763 = vadd.xlane.f32.xlu0 %v762
          %v764 = vpop.xlane.xlu0 %763
          %v765 = vrot.slane %v764, 4
          %v766 = vadd.f32 %v764, %v765
          %v767 = vrot.slane %v766, 2
          %v768 = vadd.f32 %v766, %v767
          %v769 = vrot.slane %v768, 1
          %v770 = vadd.f32 %v768, %v769
          %s771 = vtos %v770
          %s772 = scalar_lea.smem [#allocation9], 1
          %773 = sst [smem:[%s772]] %s771
          %v774 = vld [vmem:[#allocation2] sm:$0xff]
          %775 = vadd.xlane.f32.xlu0 %v774
          %v776 = vpop.xlane.xlu0 %775
          %v777 = vrot.slane %v776, 4
          %v778 = vadd.f32 %v776, %v777
          %v779 = vrot.slane %v778, 2
          %v780 = vadd.f32 %v778, %v779
          %v781 = vrot.slane %v780, 1
          %v782 = vadd.f32 %v780, %v781
          %s783 = vtos %v782
          %s784 = scalar_lea.smem [#allocation9], 2
          %785 = sst [smem:[%s784]] %s783
          %v786 = vld [vmem:[#allocation3] sm:$0xff]
          %787 = vadd.xlane.f32.xlu0 %v786
          %v788 = vpop.xlane.xlu0 %787
          %v789 = vrot.slane %v788, 4
          %v790 = vadd.f32 %v788, %v789
          %v791 = vrot.slane %v790, 2
          %v792 = vadd.f32 %v790, %v791
          %v793 = vrot.slane %v792, 1
          %v794 = vadd.f32 %v792, %v793
          %s795 = vtos %v794
          %s796 = scalar_lea.smem [#allocation9], 3
          %797 = sst [smem:[%s796]] %s795
          %v798 = vld [vmem:[#allocation4] sm:$0xff]
          %799 = vadd.xlane.f32.xlu0 %v798
          %v800 = vpop.xlane.xlu0 %799
          %v801 = vrot.slane %v800, 4
          %v802 = vadd.f32 %v800, %v801
          %v803 = vrot.slane %v802, 2
          %v804 = vadd.f32 %v802, %v803
          %v805 = vrot.slane %v804, 1
          %v806 = vadd.f32 %v804, %v805
          %s807 = vtos %v806
          %s808 = scalar_lea.smem [#allocation9], 4
          %809 = sst [smem:[%s808]] %s807
          %v810 = vld [vmem:[#allocation5] sm:$0xff]
          %811 = vadd.xlane.f32.xlu0 %v810
          %v812 = vpop.xlane.xlu0 %811
          %v813 = vrot.slane %v812, 4
          %v814 = vadd.f32 %v812, %v813
          %v815 = vrot.slane %v814, 2
          %v816 = vadd.f32 %v814, %v815
          %v817 = vrot.slane %v816, 1
          %v818 = vadd.f32 %v816, %v817
          %s819 = vtos %v818
          %s820 = scalar_lea.smem [#allocation9], 5
          %821 = sst [smem:[%s820]] %s819
          %v822 = vsel %vm749, %v743, 0.0
          %823 = vadd.xlane.f32.xlu0 %v822
          %v824 = vpop.xlane.xlu0 %823
          %v825 = vrot.slane %v824, 4
          %v826 = vadd.f32 %v824, %v825
          %v827 = vrot.slane %v826, 2
          %v828 = vadd.f32 %v826, %v827
          %v829 = vrot.slane %v828, 1
          %v830 = vadd.f32 %v828, %v829
          %s831 = vtos %v830
          %s832 = scalar_lea.smem [#allocation9], 6
          %833 = sst [smem:[%s832]] %s831
          %v834 = vsel %vm749, %v748, 0.0
          %835 = vadd.xlane.f32.xlu0 %v834
          %v836 = vpop.xlane.xlu0 %835
          %v837 = vrot.slane %v836, 4
          %v838 = vadd.f32 %v836, %v837
          %v839 = vrot.slane %v838, 2
          %v840 = vadd.f32 %v838, %v839
          %v841 = vrot.slane %v840, 1
          %v842 = vadd.f32 %v840, %v841
          %s843 = vtos %v842
          %s844 = scalar_lea.smem [#allocation9], 7
          %845 = sst [smem:[%s844]] %s843
        $region76: #{cross_loss.1} parent=67 // pred_fallthru
          _
        // Predicated region
        $region77: #{cross_loss.1} parent=67 // pred_check
          %p846 = pneg %p377
        $region78: #{cross_loss.1} parent=67 // pred_check_branch
          %848 = sbr.rel (%p846) target = $region80
        $region79: #{cross_loss.1} parent=67 // pred_region
          %s850 = ssub.s32 16, 16
          %851 = vsyncadd [#allocation10], %s850
          %s853 = sshll.u32 %s14, 4
          %s854 = int_to_ptr.vmem [resolvable:$true] %s853
          %856 = dma.smem_to_vmem [#allocation9], 16, %s854, [#allocation10]
        $region80: #{cross_loss.1} parent=67 // pred_fallthru
          _
        // Predicated region
        $region81: #{cross_loss.1} parent=67 // pred_check
          %p857 = pneg %p377
        $region82: #{cross_loss.1} parent=67 // pred_check_branch
          %859 = sbr.rel (%p857) target = $region84
        $region83: #{cross_loss.1} parent=67 // pred_region
          %860 = dma.done [#allocation10], 16
        $region84: #{cross_loss.1} parent=67 // pred_fallthru
          _
        %861 = sfence
      $region68: #{cross_loss.1} parent=5 // pred_fallthru
        _
      %p862 = scmp.le.s32.totalorder 2, %s31
      // Predicated region
      $region85: #{cross_loss.1} parent=5 // pred_check
        %p863 = pneg %p862
      $region86: #{cross_loss.1} parent=5 // pred_check_branch
        %865 = sbr.rel (%p863) target = $region88
      $region87: #{cross_loss.1} parent=5 // pred_region
        %s866 = ssub.s32 %s31, 2
      $region88: #{cross_loss.1} parent=5 // pred_fallthru
        _
    $region6: #{cross_loss.1} parent=1 // loop_footer
      %s35 = sadd.s32 1, %s31
    $region7: #{cross_loss.1} parent=1 // loop_footer_branch
      %30 = sbr.rel target = $region3
    $region8: #{cross_loss.1} parent=1 // loop_exit
      _
    %867 = vsyncpa [#allocation10], 1
    %s868 = scalar_lea.sflag [#allocation10], 1
    %869 = vsyncpa %s868, 1

</llo_original>
